<compile_context>
chip_gen: v7x
topology: tpu7x:2x2x1
jax: 0.10.0
libtpu: 0.0.40
codegen_flags: <defaults>
</compile_context>

<pallas_src>
import functools

import jax
import jax.numpy as jnp
from jax.experimental import pallas as pl
from jax.experimental.pallas import tpu as pltpu


CIN_P = 8  # input channels padded to a full sublane group


def _round_up(v, m):
    return (v + m - 1) // m * m


def _has_multiple_tensorcores():
    """True on dual-TensorCore chips (v7x): keep a parallel batch grid axis."""
    try:
        kind = jax.devices()[0].device_kind.lower()
    except Exception:
        return False
    return "v7" in kind


def _dilation_conv_kernel(x_ref, w_ref, b_ref, o_ref, *, wp, mxu_dtype):
    # x_ref: (1, CIN_P, Lin)        f32 zero-padded, row-flattened input slab
    # w_ref: (3*Cout, 27*CIN_P)     mxu_dtype block-structured fused weights
    # b_ref: (3*Cout, 1)            f32 biases (dilation-major)
    # o_ref: (1, 3*Cout, Lout)      f32 output (junk lanes stripped outside)
    lout = o_ref.shape[-1]

    # Hoist the bf16 cast: cast the whole slab once, not per-dilation patches.
    x = x_ref[0].astype(mxu_dtype)                       # (CIN_P, Lin)

    # im2col: 27 contiguous, statically-offset lane-dense (8, Lout) slices,
    # stacked along the contraction axis (tap-major, channel-minor).
    taps = []
    for d in (1, 2, 3):
        for ky in range(3):
            for kx in range(3):
                off = (3 + d * (ky - 1)) * wp + (3 + d * (kx - 1))
                taps.append(x[:, off:off + lout])
    patches = jnp.concatenate(taps, axis=0)              # (27*CIN_P, Lout)

    # ONE fused MXU matmul for all three dilations (f32 accumulation),
    # f32 bias add, single lane-dense store.
    acc = jnp.dot(w_ref[...], patches, preferred_element_type=jnp.float32)
    o_ref[0] = (acc + b_ref[...]).astype(o_ref.dtype)


def dilation_conv(x, w1, b1, w2, b2, w3, b3, *,
                  mxu_dtype=jnp.bfloat16, fold_batch=None):
    """Pallas implementation of DilationConv.forward (NCHW in, NCHW out).

    x : (N, Cin, H, W) float32
    wK: (Cout, Cin, 3, 3) torch OIHW layout, bK: (Cout,)
    returns (N, 3*Cout, H, W), channel order = torch.cat([c1, c2, c3], dim=1)
    """
    N, cin, H, W = x.shape
    cout = w1.shape[0]
    assert cin <= CIN_P

    if fold_batch is None:
        # Single-TC chips (v5e/v6e): collapse the grid (one big lane-dense
        # step). Dual-TC v7x: keep grid=(N,) parallel so both cores get work.
        fold_batch = not _has_multiple_tensorcores()
    if N == 1:
        fold_batch = True

    WP = _round_up(W + 6, 8)       # padded row width (>= W + 6)
    HP = H + 7                     # 3 pad rows on top, 4 at the bottom
    nb = N if fold_batch else 1    # batches handled per kernel step

    # Output lane extent per step: multiple of 128 -> unmasked vst.
    lout = _round_up((nb - 1) * HP * WP + H * WP, 128)
    # Input lane extent per step: must cover the largest tap offset.
    lin = _round_up(max(nb * HP * WP, lout + 6 * WP + 6), 128)

    # Zero-pad channels to a full sublane group + spatial pad, flatten rows.
    x_pad = jnp.pad(x, ((0, 0), (0, CIN_P - cin),
                        (3, HP - H - 3), (3, WP - W - 3)))
    if fold_batch:
        x_flat = jnp.transpose(x_pad, (1, 0, 2, 3)).reshape(1, CIN_P,
                                                            N * HP * WP)
    else:
        x_flat = x_pad.reshape(N, CIN_P, HP * WP)
    x_flat = jnp.pad(x_flat, ((0, 0), (0, 0), (0, lin - x_flat.shape[-1])))

    # Fused block-structured weight: rows = dilation-major output channels,
    # cols = 27 taps (dilation-major, ky, kx) x CIN_P channels; zeros off-block.
    def rearr(w):                  # OIHW -> (Cout, 9*CIN_P), tap-major K order
        w = jnp.pad(w, ((0, 0), (0, CIN_P - cin), (0, 0), (0, 0)))
        return jnp.transpose(w, (0, 2, 3, 1)).reshape(cout, 9 * CIN_P)

    w_big = jnp.zeros((3 * cout, 27 * CIN_P), jnp.float32)
    for di, w in enumerate((w1, w2, w3)):
        w_big = w_big.at[di * cout:(di + 1) * cout,
                         di * 9 * CIN_P:(di + 1) * 9 * CIN_P].set(rearr(w))
    w_big = w_big.astype(mxu_dtype)

    b_stack = jnp.concatenate([b1, b2, b3]).astype(jnp.float32).reshape(
        3 * cout, 1)

    grid_n = 1 if fold_batch else N
    out_flat = pl.pallas_call(
        functools.partial(_dilation_conv_kernel, wp=WP, mxu_dtype=mxu_dtype),
        out_shape=jax.ShapeDtypeStruct((grid_n, 3 * cout, lout), x.dtype),
        grid_spec=pltpu.PrefetchScalarGridSpec(
            num_scalar_prefetch=0,
            grid=(grid_n,),
            in_specs=[
                pl.BlockSpec((1, CIN_P, lin), lambda n: (n, 0, 0)),
                pl.BlockSpec((3 * cout, 27 * CIN_P), lambda n: (0, 0)),
                pl.BlockSpec((3 * cout, 1), lambda n: (0, 0)),
            ],
            out_specs=pl.BlockSpec((1, 3 * cout, lout), lambda n: (n, 0, 0)),
        ),
        compiler_params=pltpu.CompilerParams(
            dimension_semantics=("parallel",)),
    )(x_flat, w_big, b_stack)

    # Strip junk lanes/rows/cols and restore (N, 3*Cout, H, W).
    if fold_batch:
        y = out_flat[0]                               # (3*Cout, lout)
        need = N * HP * WP
        if lout < need:
            y = jnp.pad(y, ((0, 0), (0, need - lout)))
        else:
            y = y[:, :need]
        y = y.reshape(3 * cout, N, HP, WP)[:, :, :H, :W]
        y = jnp.transpose(y, (1, 0, 2, 3))
    else:
        y = out_flat[..., :H * WP].reshape(N, 3 * cout, H, WP)[..., :W]
    return y


def _reference(x, w1, b1, w2, b2, w3, b3):
    """Pure-JAX reference (lax conv, full f32) matching PyTorch semantics."""
    dn = ("NCHW", "OIHW", "NCHW")
    outs = []
    for (w, b, d) in ((w1, b1, 1), (w2, b2, 2), (w3, b3, 3)):
        y = jax.lax.conv_general_dilated(
            x, w, window_strides=(1, 1), padding=[(d, d), (d, d)],
            rhs_dilation=(d, d), dimension_numbers=dn,
            precision=jax.lax.Precision.HIGHEST)
        outs.append(y + b[None, :, None, None])
    return jnp.concatenate(outs, axis=1)


if __name__ == "__main__":
    key = jax.random.PRNGKey(0)
    N, Cin, Cout, H, W = 2, 4, 4, 16, 16

    k = jax.random.split(key, 7)
    x = jax.random.normal(k[0], (N, Cin, H, W), jnp.float32)
    scale = 1.0 / (Cin * 9) ** 0.5
    w1 = jax.random.normal(k[1], (Cout, Cin, 3, 3), jnp.float32) * scale
    w2 = jax.random.normal(k[2], (Cout, Cin, 3, 3), jnp.float32) * scale
    w3 = jax.random.normal(k[3], (Cout, Cin, 3, 3), jnp.float32) * scale
    b1 = jax.random.normal(k[4], (Cout,), jnp.float32) * scale
    b2 = jax.random.normal(k[5], (Cout,), jnp.float32) * scale
    b3 = jax.random.normal(k[6], (Cout,), jnp.float32) * scale

    # Exercise both grid shapes (auto-selected path + the other one).
    out = dilation_conv(x, w1, b1, w2, b2, w3, b3)
    out = jax.block_until_ready(out)
    assert out.shape == (N, 3 * Cout, H, W), out.shape
    out_alt = dilation_conv(x, w1, b1, w2, b2, w3, b3,
                            fold_batch=not _has_multiple_tensorcores() ^ True)
    out_alt = jax.block_until_ready(out_alt)

    # Matched-precision check: reference with operands rounded to bf16 exactly
    # like the kernel rounds its MXU operands (f32 accumulation in both).
    rd = lambda a: a.astype(jnp.bfloat16).astype(jnp.float32)
    ref_bf16 = _reference(rd(x), rd(w1), b1, rd(w2), b2, rd(w3), b3)
    err = float(jnp.max(jnp.abs(out - ref_bf16)))
    assert jnp.allclose(out, ref_bf16, atol=1e-3, rtol=1e-3), err
    err_alt = float(jnp.max(jnp.abs(out_alt - ref_bf16)))
    assert jnp.allclose(out_alt, ref_bf16, atol=1e-3, rtol=1e-3), err_alt

    # Sanity check against the full-f32 reference (bounds bf16 operand
    # rounding; K per dilation is only 36 so the rounding error is small).
    ref_f32 = _reference(x, w1, b1, w2, b2, w3, b3)
    err32 = float(jnp.max(jnp.abs(out - ref_f32)))
    assert jnp.allclose(out, ref_f32, atol=5e-2, rtol=5e-2), err32

    print("KERNEL_OK")
</pallas_src>

<mosaic_0001>
module attributes {stable_mosaic.version = 11 : i64} {
  func.func @_dilation_conv_kernel(%arg0: i32, %arg1: memref<1x8x1280xf32, #tpu.memory_space<vmem>>, %arg2: memref<12x216xbf16, #tpu.memory_space<vmem>>, %arg3: memref<12x1xf32, #tpu.memory_space<vmem>>, %arg4: memref<1x12x1024xf32, #tpu.memory_space<vmem>>) attributes {dimension_semantics = [#tpu.dimension_semantics<parallel>], iteration_bounds = array<i64: 1>, scalar_prefetch = 0 : i64, scratch_operands = 0 : i64, tpu.core_type = #tpu.core_type<tc>, window_params = [{transform_indices = @transform_0, window_bounds = array<i64: 1, 8, 1280>}, {pipeline_mode = #tpu.pipeline_mode<synchronous>, transform_indices = @transform_1, window_bounds = array<i64: 12, 216>}, {pipeline_mode = #tpu.pipeline_mode<synchronous>, transform_indices = @transform_2, window_bounds = array<i64: 12, 1>}, {transform_indices = @transform_3, window_bounds = array<i64: 1, 12, 1024>}]} {
    %c0 = arith.constant 0 : index
    %c0_0 = arith.constant 0 : index
    %c0_1 = arith.constant 0 : index
    %0 = vector.load %arg1[%c0, %c0_0, %c0_1] : memref<1x8x1280xf32, #tpu.memory_space<vmem>>, vector<1x8x1280xf32>
    %1 = vector.shape_cast %0 : vector<1x8x1280xf32> to vector<8x1280xf32>
    %2 = arith.truncf %1 : vector<8x1280xf32> to vector<8x1280xbf16>
    %3 = vector.extract_strided_slice %2 {offsets = [0, 50], sizes = [8, 1024], strides = [1, 1]} : vector<8x1280xbf16> to vector<8x1024xbf16>
    %4 = vector.extract_strided_slice %2 {offsets = [0, 51], sizes = [8, 1024], strides = [1, 1]} : vector<8x1280xbf16> to vector<8x1024xbf16>
    %5 = vector.extract_strided_slice %2 {offsets = [0, 52], sizes = [8, 1024], strides = [1, 1]} : vector<8x1280xbf16> to vector<8x1024xbf16>
    %6 = vector.extract_strided_slice %2 {offsets = [0, 74], sizes = [8, 1024], strides = [1, 1]} : vector<8x1280xbf16> to vector<8x1024xbf16>
    %7 = vector.extract_strided_slice %2 {offsets = [0, 75], sizes = [8, 1024], strides = [1, 1]} : vector<8x1280xbf16> to vector<8x1024xbf16>
    %8 = vector.extract_strided_slice %2 {offsets = [0, 76], sizes = [8, 1024], strides = [1, 1]} : vector<8x1280xbf16> to vector<8x1024xbf16>
    %9 = vector.extract_strided_slice %2 {offsets = [0, 98], sizes = [8, 1024], strides = [1, 1]} : vector<8x1280xbf16> to vector<8x1024xbf16>
    %10 = vector.extract_strided_slice %2 {offsets = [0, 99], sizes = [8, 1024], strides = [1, 1]} : vector<8x1280xbf16> to vector<8x1024xbf16>
    %11 = vector.extract_strided_slice %2 {offsets = [0, 100], sizes = [8, 1024], strides = [1, 1]} : vector<8x1280xbf16> to vector<8x1024xbf16>
    %12 = vector.extract_strided_slice %2 {offsets = [0, 25], sizes = [8, 1024], strides = [1, 1]} : vector<8x1280xbf16> to vector<8x1024xbf16>
    %13 = vector.extract_strided_slice %2 {offsets = [0, 27], sizes = [8, 1024], strides = [1, 1]} : vector<8x1280xbf16> to vector<8x1024xbf16>
    %14 = vector.extract_strided_slice %2 {offsets = [0, 29], sizes = [8, 1024], strides = [1, 1]} : vector<8x1280xbf16> to vector<8x1024xbf16>
    %15 = vector.extract_strided_slice %2 {offsets = [0, 73], sizes = [8, 1024], strides = [1, 1]} : vector<8x1280xbf16> to vector<8x1024xbf16>
    %16 = vector.extract_strided_slice %2 {offsets = [0, 75], sizes = [8, 1024], strides = [1, 1]} : vector<8x1280xbf16> to vector<8x1024xbf16>
    %17 = vector.extract_strided_slice %2 {offsets = [0, 77], sizes = [8, 1024], strides = [1, 1]} : vector<8x1280xbf16> to vector<8x1024xbf16>
    %18 = vector.extract_strided_slice %2 {offsets = [0, 121], sizes = [8, 1024], strides = [1, 1]} : vector<8x1280xbf16> to vector<8x1024xbf16>
    %19 = vector.extract_strided_slice %2 {offsets = [0, 123], sizes = [8, 1024], strides = [1, 1]} : vector<8x1280xbf16> to vector<8x1024xbf16>
    %20 = vector.extract_strided_slice %2 {offsets = [0, 125], sizes = [8, 1024], strides = [1, 1]} : vector<8x1280xbf16> to vector<8x1024xbf16>
    %21 = vector.extract_strided_slice %2 {offsets = [0, 0], sizes = [8, 1024], strides = [1, 1]} : vector<8x1280xbf16> to vector<8x1024xbf16>
    %22 = vector.extract_strided_slice %2 {offsets = [0, 3], sizes = [8, 1024], strides = [1, 1]} : vector<8x1280xbf16> to vector<8x1024xbf16>
    %23 = vector.extract_strided_slice %2 {offsets = [0, 6], sizes = [8, 1024], strides = [1, 1]} : vector<8x1280xbf16> to vector<8x1024xbf16>
    %24 = vector.extract_strided_slice %2 {offsets = [0, 72], sizes = [8, 1024], strides = [1, 1]} : vector<8x1280xbf16> to vector<8x1024xbf16>
    %25 = vector.extract_strided_slice %2 {offsets = [0, 75], sizes = [8, 1024], strides = [1, 1]} : vector<8x1280xbf16> to vector<8x1024xbf16>
    %26 = vector.extract_strided_slice %2 {offsets = [0, 78], sizes = [8, 1024], strides = [1, 1]} : vector<8x1280xbf16> to vector<8x1024xbf16>
    %27 = vector.extract_strided_slice %2 {offsets = [0, 144], sizes = [8, 1024], strides = [1, 1]} : vector<8x1280xbf16> to vector<8x1024xbf16>
    %28 = vector.extract_strided_slice %2 {offsets = [0, 147], sizes = [8, 1024], strides = [1, 1]} : vector<8x1280xbf16> to vector<8x1024xbf16>
    %29 = vector.extract_strided_slice %2 {offsets = [0, 150], sizes = [8, 1024], strides = [1, 1]} : vector<8x1280xbf16> to vector<8x1024xbf16>
    %30 = tpu.concatenate %3, %4, %5, %6, %7, %8, %9, %10, %11, %12, %13, %14, %15, %16, %17, %18 in 0 : vector<8x1024xbf16>, vector<8x1024xbf16>, vector<8x1024xbf16>, vector<8x1024xbf16>, vector<8x1024xbf16>, vector<8x1024xbf16>, vector<8x1024xbf16>, vector<8x1024xbf16>, vector<8x1024xbf16>, vector<8x1024xbf16>, vector<8x1024xbf16>, vector<8x1024xbf16>, vector<8x1024xbf16>, vector<8x1024xbf16>, vector<8x1024xbf16>, vector<8x1024xbf16> -> vector<128x1024xbf16>
    %31 = tpu.concatenate %19, %20, %21, %22, %23, %24, %25, %26, %27, %28, %29 in 0 : vector<8x1024xbf16>, vector<8x1024xbf16>, vector<8x1024xbf16>, vector<8x1024xbf16>, vector<8x1024xbf16>, vector<8x1024xbf16>, vector<8x1024xbf16>, vector<8x1024xbf16>, vector<8x1024xbf16>, vector<8x1024xbf16>, vector<8x1024xbf16> -> vector<88x1024xbf16>
    %32 = tpu.concatenate %30, %31 in 0 : vector<128x1024xbf16>, vector<88x1024xbf16> -> vector<216x1024xbf16>
    %c0_2 = arith.constant 0 : index
    %c0_3 = arith.constant 0 : index
    %33 = vector.load %arg2[%c0_2, %c0_3] : memref<12x216xbf16, #tpu.memory_space<vmem>>, vector<12x216xbf16>
    %cst = arith.constant dense<0.000000e+00> : vector<12x1024xf32>
    %34 = tpu.matmul %33, %32, %cst {dimension_numbers = #tpu.dot_dimension_numbers<[1], [0], [0], [1], [0, 0, 1, 1], [], []>} : vector<12x216xbf16>, vector<216x1024xbf16>, vector<12x1024xf32> -> vector<12x1024xf32>
    %c0_4 = arith.constant 0 : index
    %c0_5 = arith.constant 0 : index
    %35 = vector.load %arg3[%c0_4, %c0_5] : memref<12x1xf32, #tpu.memory_space<vmem>>, vector<12x1xf32>
    %36 = vector.broadcast %35 : vector<12x1xf32> to vector<12x1024xf32>
    %37 = arith.addf %34, %36 : vector<12x1024xf32>
    %c0_6 = arith.constant 0 : index
    %c0_7 = arith.constant 0 : index
    %c0_8 = arith.constant 0 : index
    %38 = vector.load %arg4[%c0_6, %c0_7, %c0_8] : memref<1x12x1024xf32, #tpu.memory_space<vmem>>, vector<1x12x1024xf32>
    %39 = vector.shape_cast %38 : vector<1x12x1024xf32> to vector<12x1024xf32>
    %40 = vector.shape_cast %37 : vector<12x1024xf32> to vector<1x12x1024xf32>
    tpu.vector_store %arg4[%c0_6, %c0_7, %c0_8], %40 {strides = array<i32>} : memref<1x12x1024xf32, #tpu.memory_space<vmem>>, vector<1x12x1024xf32>,
    return
  }
  func.func @transform_0(%arg0: i32) -> (i32, i32, i32) {
    %c0_i32 = arith.constant 0 : i32
    %c0_i32_0 = arith.constant 0 : i32
    %c0_i32_1 = arith.constant 0 : i32
    return %arg0, %c0_i32, %c0_i32_0 : i32, i32, i32
  }
  func.func @transform_1(%arg0: i32) -> (i32, i32) {
    %c0_i32 = arith.constant 0 : i32
    %c0_i32_0 = arith.constant 0 : i32
    %c0_i32_1 = arith.constant 0 : i32
    return %c0_i32, %c0_i32_0 : i32, i32
  }
  func.func @transform_2(%arg0: i32) -> (i32, i32) {
    %c0_i32 = arith.constant 0 : i32
    %c0_i32_0 = arith.constant 0 : i32
    %c0_i32_1 = arith.constant 0 : i32
    return %c0_i32, %c0_i32_0 : i32, i32
  }
  func.func @transform_3(%arg0: i32) -> (i32, i32, i32) {
    %c0_i32 = arith.constant 0 : i32
    %c0_i32_0 = arith.constant 0 : i32
    %c0_i32_1 = arith.constant 0 : i32
    return %arg0, %c0_i32, %c0_i32_0 : i32, i32, i32
  }
}

</mosaic_0001>

<llo_original>
// kernel: tpu_custom_call.1
$region0: #{tpu_custom_call.1}
  #allocation0 [shape = 'u32[]', space=smem, size = 0x4, offset = 0x4, fixed_abs, tag = 'smem constant byte address 0x4 - core index']
  #allocation1 [shape = 'u32[144,128]{1,0:T(1,128)}', space=vmem, size = 0x12000, scoped, tag = 'internal scratch']
  %s0 = inlined_call_operand.hbm [shape: f32[1,8,1280], index: 0, kind: input, shape index: {}]
  %s1 = inlined_call_operand.vmem [shape: bf16[12,216], index: 1, kind: input, shape index: {}]
  %s2 = inlined_call_operand.vmem [shape: f32[12,1], index: 2, kind: input, shape index: {}]
  %s3 = inlined_call_operand.vmem [shape: f32[1,12,1024], index: 3, kind: output, shape index: {}]
  %s4 = sld [smem:[#allocation0]]
  $region26: #{tpu_custom_call.1} parent=0
    _
  %s6 = ssub.s32 1, %s4
  %s7 = scalar_select 0, %s6, %s4
  $region1: #{tpu_custom_call.1} parent=0
    #allocation2 [shape = 'u8[40960]{0}', space=vmem, size = 0xa000, scoped, tag = 'input window, operand 0, single buffered']
    #allocation3 [shape = 's32[1]{0}', space=sflag, size = 0x4, scoped, tag = 'scoped memory for tpu_custom_call.1']
    %8 = vsyncpa [#allocation3], 0
    // Predicated region
    $region2: #{tpu_custom_call.1} parent=1 // pred_check
      _
    $region3: #{tpu_custom_call.1} parent=1 // pred_check_branch
      %10 = sbr.rel (0) target = $region5
    $region4: #{tpu_custom_call.1} parent=1 // pred_region
      %s12 = ssub.s32 1280, 1280
      %13 = vsyncadd [#allocation3], %s12
      %s15 = sshll.u32 [#allocation2], 4
      %s16 = int_to_ptr.vmem [resolvable:$true] %s15
      %18 = dma.hbm_to_vmem [thread:$0]  %s0, 1280, %s16, [#allocation3]
    $region5: #{tpu_custom_call.1} parent=1 // pred_fallthru
      _
    // Predicated region
    $region6: #{tpu_custom_call.1} parent=1 // pred_check
      _
    $region7: #{tpu_custom_call.1} parent=1 // pred_check_branch
      %20 = sbr.rel (0) target = $region9
    $region8: #{tpu_custom_call.1} parent=1 // pred_region
      _
    $region9: #{tpu_custom_call.1} parent=1 // pred_fallthru
      _
    // Predicated region
    $region10: #{tpu_custom_call.1} parent=1 // pred_check
      _
    $region11: #{tpu_custom_call.1} parent=1 // pred_check_branch
      %22 = sbr.rel (0) target = $region13
    $region12: #{tpu_custom_call.1} parent=1 // pred_region
      _
    $region13: #{tpu_custom_call.1} parent=1 // pred_fallthru
      _
    // Predicated region
    $region14: #{tpu_custom_call.1} parent=1 // pred_check
      _
    $region15: #{tpu_custom_call.1} parent=1 // pred_check_branch
      %24 = sbr.rel (0) target = $region17
    $region16: #{tpu_custom_call.1} parent=1 // pred_region
      %25 = dma.done [#allocation3], 1280
    $region17: #{tpu_custom_call.1} parent=1 // pred_fallthru
      _
    %v27 = vld [vmem:[#allocation2] sm:$0xff]
    %v28 = vld [vmem:[#allocation2 + $0x8] sm:$0xff]
    %v29 = vld [vmem:[#allocation2 + $0x10] sm:$0xff]
    %v30 = vld [vmem:[#allocation2 + $0x18] sm:$0xff]
    %v31 = vld [vmem:[#allocation2 + $0x20] sm:$0xff]
    %v32 = vld [vmem:[#allocation2 + $0x28] sm:$0xff]
    %v33 = vld [vmem:[#allocation2 + $0x30] sm:$0xff]
    %v34 = vld [vmem:[#allocation2 + $0x38] sm:$0xff]
    %v35 = vld [vmem:[#allocation2 + $0x40] sm:$0xff]
    %v36 = vld [vmem:[#allocation2 + $0x48] sm:$0xff]
    %v37 = vpack.c.bf16 %v27, %v27
    %v38 = vpack.c.bf16 %v28, %v28
    %v39 = vpack.c.bf16 %v29, %v29
    %v40 = vpack.c.bf16 %v30, %v30
    %v41 = vpack.c.bf16 %v31, %v31
    %v42 = vpack.c.bf16 %v32, %v32
    %v43 = vpack.c.bf16 %v33, %v33
    %v44 = vpack.c.bf16 %v34, %v34
    %v45 = vpack.c.bf16 %v35, %v35
    %v46 = vpack.c.bf16 %v36, %v36
    %v56 = vrot.slane %v37, 4
    %v57 = vrot.slane %v38, 4
    %v58 = vrot.slane %v39, 4
    %v59 = vrot.slane %v40, 4
    %v60 = vrot.slane %v41, 4
    %v61 = vrot.slane %v42, 4
    %v62 = vrot.slane %v43, 4
    %v63 = vrot.slane %v44, 4
    %v64 = vrot.slane %v45, 4
    %65 = vrot.lane.b32.xlu0 %v56, 127
    %v66 = vpop.permute.xlu0 %65
    %67 = vrot.lane.b32.xlu0 %v57, 127
    %v68 = vpop.permute.xlu0 %67
    %69 = vrot.lane.b32.xlu0 %v58, 127
    %v70 = vpop.permute.xlu0 %69
    %71 = vrot.lane.b32.xlu0 %v59, 127
    %v72 = vpop.permute.xlu0 %71
    %73 = vrot.lane.b32.xlu0 %v60, 127
    %v74 = vpop.permute.xlu0 %73
    %75 = vrot.lane.b32.xlu0 %v61, 127
    %v76 = vpop.permute.xlu0 %75
    %77 = vrot.lane.b32.xlu0 %v62, 127
    %v78 = vpop.permute.xlu0 %77
    %79 = vrot.lane.b32.xlu0 %v63, 127
    %v80 = vpop.permute.xlu0 %79
    %81 = vrot.lane.b32.xlu0 %v64, 127
    %v82 = vpop.permute.xlu0 %81
    %vm83 = vcmask 1039360
    %v84 = vsel %vm83, %v66, %v68
    %v85 = vsel %vm83, %v68, %v70
    %v86 = vsel %vm83, %v70, %v72
    %v87 = vsel %vm83, %v72, %v74
    %v88 = vsel %vm83, %v74, %v76
    %v89 = vsel %vm83, %v76, %v78
    %v90 = vsel %vm83, %v78, %v80
    %v91 = vsel %vm83, %v80, %v82
    %92 = vrot.lane.b32.xlu0 %v37, 126
    %v93 = vpop.permute.xlu0 %92
    %94 = vrot.lane.b32.xlu0 %v38, 126
    %v95 = vpop.permute.xlu0 %94
    %96 = vrot.lane.b32.xlu0 %v39, 126
    %v97 = vpop.permute.xlu0 %96
    %98 = vrot.lane.b32.xlu0 %v40, 126
    %v99 = vpop.permute.xlu0 %98
    %100 = vrot.lane.b32.xlu0 %v41, 126
    %v101 = vpop.permute.xlu0 %100
    %102 = vrot.lane.b32.xlu0 %v42, 126
    %v103 = vpop.permute.xlu0 %102
    %104 = vrot.lane.b32.xlu0 %v43, 126
    %v105 = vpop.permute.xlu0 %104
    %106 = vrot.lane.b32.xlu0 %v44, 126
    %v107 = vpop.permute.xlu0 %106
    %108 = vrot.lane.b32.xlu0 %v45, 126
    %v109 = vpop.permute.xlu0 %108
    %vm110 = vcmask 1031168
    %v111 = vsel %vm110, %v93, %v95
    %v112 = vsel %vm110, %v95, %v97
    %v113 = vsel %vm110, %v97, %v99
    %v114 = vsel %vm110, %v99, %v101
    %v115 = vsel %vm110, %v101, %v103
    %v116 = vsel %vm110, %v103, %v105
    %v117 = vsel %vm110, %v105, %v107
    %v118 = vsel %vm110, %v107, %v109
    %119 = vrot.lane.b32.xlu0 %v56, 104
    %v120 = vpop.permute.xlu0 %119
    %121 = vrot.lane.b32.xlu0 %v57, 104
    %v122 = vpop.permute.xlu0 %121
    %123 = vrot.lane.b32.xlu0 %v58, 104
    %v124 = vpop.permute.xlu0 %123
    %125 = vrot.lane.b32.xlu0 %v59, 104
    %v126 = vpop.permute.xlu0 %125
    %127 = vrot.lane.b32.xlu0 %v60, 104
    %v128 = vpop.permute.xlu0 %127
    %129 = vrot.lane.b32.xlu0 %v61, 104
    %v130 = vpop.permute.xlu0 %129
    %131 = vrot.lane.b32.xlu0 %v62, 104
    %v132 = vpop.permute.xlu0 %131
    %133 = vrot.lane.b32.xlu0 %v63, 104
    %v134 = vpop.permute.xlu0 %133
    %135 = vrot.lane.b32.xlu0 %v64, 104
    %v136 = vpop.permute.xlu0 %135
    %vm137 = vcmask 850944
    %v138 = vsel %vm137, %v120, %v122
    %v139 = vsel %vm137, %v122, %v124
    %v140 = vsel %vm137, %v124, %v126
    %v141 = vsel %vm137, %v126, %v128
    %v142 = vsel %vm137, %v128, %v130
    %v143 = vsel %vm137, %v130, %v132
    %v144 = vsel %vm137, %v132, %v134
    %v145 = vsel %vm137, %v134, %v136
    %146 = vrot.lane.b32.xlu0 %v37, 103
    %v147 = vpop.permute.xlu0 %146
    %148 = vrot.lane.b32.xlu0 %v38, 103
    %v149 = vpop.permute.xlu0 %148
    %150 = vrot.lane.b32.xlu0 %v39, 103
    %v151 = vpop.permute.xlu0 %150
    %152 = vrot.lane.b32.xlu0 %v40, 103
    %v153 = vpop.permute.xlu0 %152
    %154 = vrot.lane.b32.xlu0 %v41, 103
    %v155 = vpop.permute.xlu0 %154
    %156 = vrot.lane.b32.xlu0 %v42, 103
    %v157 = vpop.permute.xlu0 %156
    %158 = vrot.lane.b32.xlu0 %v43, 103
    %v159 = vpop.permute.xlu0 %158
    %160 = vrot.lane.b32.xlu0 %v44, 103
    %v161 = vpop.permute.xlu0 %160
    %162 = vrot.lane.b32.xlu0 %v45, 103
    %v163 = vpop.permute.xlu0 %162
    %vm164 = vcmask 842752
    %v165 = vsel %vm164, %v147, %v149
    %v166 = vsel %vm164, %v149, %v151
    %v167 = vsel %vm164, %v151, %v153
    %v168 = vsel %vm164, %v153, %v155
    %v169 = vsel %vm164, %v155, %v157
    %v170 = vsel %vm164, %v157, %v159
    %v171 = vsel %vm164, %v159, %v161
    %v172 = vsel %vm164, %v161, %v163
    %173 = vrot.lane.b32.xlu0 %v56, 102
    %v174 = vpop.permute.xlu0 %173
    %175 = vrot.lane.b32.xlu0 %v57, 102
    %v176 = vpop.permute.xlu0 %175
    %177 = vrot.lane.b32.xlu0 %v58, 102
    %v178 = vpop.permute.xlu0 %177
    %179 = vrot.lane.b32.xlu0 %v59, 102
    %v180 = vpop.permute.xlu0 %179
    %181 = vrot.lane.b32.xlu0 %v60, 102
    %v182 = vpop.permute.xlu0 %181
    %183 = vrot.lane.b32.xlu0 %v61, 102
    %v184 = vpop.permute.xlu0 %183
    %185 = vrot.lane.b32.xlu0 %v62, 102
    %v186 = vpop.permute.xlu0 %185
    %187 = vrot.lane.b32.xlu0 %v63, 102
    %v188 = vpop.permute.xlu0 %187
    %189 = vrot.lane.b32.xlu0 %v64, 102
    %v190 = vpop.permute.xlu0 %189
    %vm191 = vcmask 834560
    %v192 = vsel %vm191, %v174, %v176
    %v193 = vsel %vm191, %v176, %v178
    %v194 = vsel %vm191, %v178, %v180
    %v195 = vsel %vm191, %v180, %v182
    %v196 = vsel %vm191, %v182, %v184
    %v197 = vsel %vm191, %v184, %v186
    %v198 = vsel %vm191, %v186, %v188
    %v199 = vsel %vm191, %v188, %v190
    %200 = vrot.lane.b32.xlu0 %v37, 80
    %v201 = vpop.permute.xlu0 %200
    %202 = vrot.lane.b32.xlu0 %v38, 80
    %v203 = vpop.permute.xlu0 %202
    %204 = vrot.lane.b32.xlu0 %v39, 80
    %v205 = vpop.permute.xlu0 %204
    %206 = vrot.lane.b32.xlu0 %v40, 80
    %v207 = vpop.permute.xlu0 %206
    %208 = vrot.lane.b32.xlu0 %v41, 80
    %v209 = vpop.permute.xlu0 %208
    %210 = vrot.lane.b32.xlu0 %v42, 80
    %v211 = vpop.permute.xlu0 %210
    %212 = vrot.lane.b32.xlu0 %v43, 80
    %v213 = vpop.permute.xlu0 %212
    %214 = vrot.lane.b32.xlu0 %v44, 80
    %v215 = vpop.permute.xlu0 %214
    %216 = vrot.lane.b32.xlu0 %v45, 80
    %v217 = vpop.permute.xlu0 %216
    %vm218 = vcmask 654336
    %v219 = vsel %vm218, %v201, %v203
    %v220 = vsel %vm218, %v203, %v205
    %v221 = vsel %vm218, %v205, %v207
    %v222 = vsel %vm218, %v207, %v209
    %v223 = vsel %vm218, %v209, %v211
    %v224 = vsel %vm218, %v211, %v213
    %v225 = vsel %vm218, %v213, %v215
    %v226 = vsel %vm218, %v215, %v217
    %227 = vrot.lane.b32.xlu0 %v56, 79
    %v228 = vpop.permute.xlu0 %227
    %229 = vrot.lane.b32.xlu0 %v57, 79
    %v230 = vpop.permute.xlu0 %229
    %231 = vrot.lane.b32.xlu0 %v58, 79
    %v232 = vpop.permute.xlu0 %231
    %233 = vrot.lane.b32.xlu0 %v59, 79
    %v234 = vpop.permute.xlu0 %233
    %235 = vrot.lane.b32.xlu0 %v60, 79
    %v236 = vpop.permute.xlu0 %235
    %237 = vrot.lane.b32.xlu0 %v61, 79
    %v238 = vpop.permute.xlu0 %237
    %239 = vrot.lane.b32.xlu0 %v62, 79
    %v240 = vpop.permute.xlu0 %239
    %241 = vrot.lane.b32.xlu0 %v63, 79
    %v242 = vpop.permute.xlu0 %241
    %243 = vrot.lane.b32.xlu0 %v64, 79
    %v244 = vpop.permute.xlu0 %243
    %vm245 = vcmask 646144
    %v246 = vsel %vm245, %v228, %v230
    %v247 = vsel %vm245, %v230, %v232
    %v248 = vsel %vm245, %v232, %v234
    %v249 = vsel %vm245, %v234, %v236
    %v250 = vsel %vm245, %v236, %v238
    %v251 = vsel %vm245, %v238, %v240
    %v252 = vsel %vm245, %v240, %v242
    %v253 = vsel %vm245, %v242, %v244
    %254 = vrot.lane.b32.xlu0 %v37, 78
    %v255 = vpop.permute.xlu0 %254
    %256 = vrot.lane.b32.xlu0 %v38, 78
    %v257 = vpop.permute.xlu0 %256
    %258 = vrot.lane.b32.xlu0 %v39, 78
    %v259 = vpop.permute.xlu0 %258
    %260 = vrot.lane.b32.xlu0 %v40, 78
    %v261 = vpop.permute.xlu0 %260
    %262 = vrot.lane.b32.xlu0 %v41, 78
    %v263 = vpop.permute.xlu0 %262
    %264 = vrot.lane.b32.xlu0 %v42, 78
    %v265 = vpop.permute.xlu0 %264
    %266 = vrot.lane.b32.xlu0 %v43, 78
    %v267 = vpop.permute.xlu0 %266
    %268 = vrot.lane.b32.xlu0 %v44, 78
    %v269 = vpop.permute.xlu0 %268
    %270 = vrot.lane.b32.xlu0 %v45, 78
    %v271 = vpop.permute.xlu0 %270
    %vm272 = vcmask 637952
    %v273 = vsel %vm272, %v255, %v257
    %v274 = vsel %vm272, %v257, %v259
    %v275 = vsel %vm272, %v259, %v261
    %v276 = vsel %vm272, %v261, %v263
    %v277 = vsel %vm272, %v263, %v265
    %v278 = vsel %vm272, %v265, %v267
    %v279 = vsel %vm272, %v267, %v269
    %v280 = vsel %vm272, %v269, %v271
    %281 = vrot.lane.b32.xlu0 %v56, 25
    %v282 = vpop.permute.xlu0 %281
    %283 = vrot.lane.b32.xlu0 %v57, 25
    %v284 = vpop.permute.xlu0 %283
    %285 = vrot.lane.b32.xlu0 %v58, 25
    %v286 = vpop.permute.xlu0 %285
    %287 = vrot.lane.b32.xlu0 %v59, 25
    %v288 = vpop.permute.xlu0 %287
    %289 = vrot.lane.b32.xlu0 %v60, 25
    %v290 = vpop.permute.xlu0 %289
    %291 = vrot.lane.b32.xlu0 %v61, 25
    %v292 = vpop.permute.xlu0 %291
    %293 = vrot.lane.b32.xlu0 %v62, 25
    %v294 = vpop.permute.xlu0 %293
    %295 = vrot.lane.b32.xlu0 %v63, 25
    %v296 = vpop.permute.xlu0 %295
    %297 = vrot.lane.b32.xlu0 %v64, 25
    %v298 = vpop.permute.xlu0 %297
    %vm299 = vcmask 203776
    %v300 = vsel %vm299, %v282, %v284
    %v301 = vsel %vm299, %v284, %v286
    %v302 = vsel %vm299, %v286, %v288
    %v303 = vsel %vm299, %v288, %v290
    %v304 = vsel %vm299, %v290, %v292
    %v305 = vsel %vm299, %v292, %v294
    %v306 = vsel %vm299, %v294, %v296
    %v307 = vsel %vm299, %v296, %v298
    %308 = vrot.lane.b32.xlu0 %v37, 23
    %v309 = vpop.permute.xlu0 %308
    %310 = vrot.lane.b32.xlu0 %v38, 23
    %v311 = vpop.permute.xlu0 %310
    %312 = vrot.lane.b32.xlu0 %v39, 23
    %v313 = vpop.permute.xlu0 %312
    %314 = vrot.lane.b32.xlu0 %v40, 23
    %v315 = vpop.permute.xlu0 %314
    %316 = vrot.lane.b32.xlu0 %v41, 23
    %v317 = vpop.permute.xlu0 %316
    %318 = vrot.lane.b32.xlu0 %v42, 23
    %v319 = vpop.permute.xlu0 %318
    %320 = vrot.lane.b32.xlu0 %v43, 23
    %v321 = vpop.permute.xlu0 %320
    %322 = vrot.lane.b32.xlu0 %v44, 23
    %v323 = vpop.permute.xlu0 %322
    %324 = vrot.lane.b32.xlu0 %v45, 23
    %v325 = vpop.permute.xlu0 %324
    %vm326 = vcmask 187392
    %v327 = vsel %vm326, %v309, %v311
    %v328 = vsel %vm326, %v311, %v313
    %v329 = vsel %vm326, %v313, %v315
    %v330 = vsel %vm326, %v315, %v317
    %v331 = vsel %vm326, %v317, %v319
    %v332 = vsel %vm326, %v319, %v321
    %v333 = vsel %vm326, %v321, %v323
    %v334 = vsel %vm326, %v323, %v325
    %335 = vrot.lane.b32.xlu0 %v56, 21
    %v336 = vpop.permute.xlu0 %335
    %337 = vrot.lane.b32.xlu0 %v57, 21
    %v338 = vpop.permute.xlu0 %337
    %339 = vrot.lane.b32.xlu0 %v58, 21
    %v340 = vpop.permute.xlu0 %339
    %341 = vrot.lane.b32.xlu0 %v59, 21
    %v342 = vpop.permute.xlu0 %341
    %343 = vrot.lane.b32.xlu0 %v60, 21
    %v344 = vpop.permute.xlu0 %343
    %345 = vrot.lane.b32.xlu0 %v61, 21
    %v346 = vpop.permute.xlu0 %345
    %347 = vrot.lane.b32.xlu0 %v62, 21
    %v348 = vpop.permute.xlu0 %347
    %349 = vrot.lane.b32.xlu0 %v63, 21
    %v350 = vpop.permute.xlu0 %349
    %351 = vrot.lane.b32.xlu0 %v64, 21
    %v352 = vpop.permute.xlu0 %351
    %vm353 = vcmask 171008
    %v354 = vsel %vm353, %v336, %v338
    %v355 = vsel %vm353, %v338, %v340
    %v356 = vsel %vm353, %v340, %v342
    %v357 = vsel %vm353, %v342, %v344
    %v358 = vsel %vm353, %v344, %v346
    %v359 = vsel %vm353, %v346, %v348
    %v360 = vsel %vm353, %v348, %v350
    %v361 = vsel %vm353, %v350, %v352
    %362 = vrot.lane.b32.xlu0 %v37, 105
    %v363 = vpop.permute.xlu0 %362
    %364 = vrot.lane.b32.xlu0 %v38, 105
    %v365 = vpop.permute.xlu0 %364
    %366 = vrot.lane.b32.xlu0 %v39, 105
    %v367 = vpop.permute.xlu0 %366
    %368 = vrot.lane.b32.xlu0 %v40, 105
    %v369 = vpop.permute.xlu0 %368
    %370 = vrot.lane.b32.xlu0 %v41, 105
    %v371 = vpop.permute.xlu0 %370
    %372 = vrot.lane.b32.xlu0 %v42, 105
    %v373 = vpop.permute.xlu0 %372
    %374 = vrot.lane.b32.xlu0 %v43, 105
    %v375 = vpop.permute.xlu0 %374
    %376 = vrot.lane.b32.xlu0 %v44, 105
    %v377 = vpop.permute.xlu0 %376
    %378 = vrot.lane.b32.xlu0 %v45, 105
    %v379 = vpop.permute.xlu0 %378
    %vm380 = vcmask 859136
    %v381 = vsel %vm380, %v363, %v365
    %v382 = vsel %vm380, %v365, %v367
    %v383 = vsel %vm380, %v367, %v369
    %v384 = vsel %vm380, %v369, %v371
    %v385 = vsel %vm380, %v371, %v373
    %v386 = vsel %vm380, %v373, %v375
    %v387 = vsel %vm380, %v375, %v377
    %v388 = vsel %vm380, %v377, %v379
    %389 = vrot.lane.b32.xlu0 %v56, 103
    %v390 = vpop.permute.xlu0 %389
    %391 = vrot.lane.b32.xlu0 %v57, 103
    %v392 = vpop.permute.xlu0 %391
    %393 = vrot.lane.b32.xlu0 %v58, 103
    %v394 = vpop.permute.xlu0 %393
    %395 = vrot.lane.b32.xlu0 %v59, 103
    %v396 = vpop.permute.xlu0 %395
    %397 = vrot.lane.b32.xlu0 %v60, 103
    %v398 = vpop.permute.xlu0 %397
    %399 = vrot.lane.b32.xlu0 %v61, 103
    %v400 = vpop.permute.xlu0 %399
    %401 = vrot.lane.b32.xlu0 %v62, 103
    %v402 = vpop.permute.xlu0 %401
    %403 = vrot.lane.b32.xlu0 %v63, 103
    %v404 = vpop.permute.xlu0 %403
    %405 = vrot.lane.b32.xlu0 %v64, 103
    %v406 = vpop.permute.xlu0 %405
    %v407 = vsel %vm164, %v390, %v392
    %v408 = vsel %vm164, %v392, %v394
    %v409 = vsel %vm164, %v394, %v396
    %v410 = vsel %vm164, %v396, %v398
    %v411 = vsel %vm164, %v398, %v400
    %v412 = vsel %vm164, %v400, %v402
    %v413 = vsel %vm164, %v402, %v404
    %v414 = vsel %vm164, %v404, %v406
    %415 = vrot.lane.b32.xlu0 %v37, 101
    %v416 = vpop.permute.xlu0 %415
    %417 = vrot.lane.b32.xlu0 %v38, 101
    %v418 = vpop.permute.xlu0 %417
    %419 = vrot.lane.b32.xlu0 %v39, 101
    %v420 = vpop.permute.xlu0 %419
    %421 = vrot.lane.b32.xlu0 %v40, 101
    %v422 = vpop.permute.xlu0 %421
    %423 = vrot.lane.b32.xlu0 %v41, 101
    %v424 = vpop.permute.xlu0 %423
    %425 = vrot.lane.b32.xlu0 %v42, 101
    %v426 = vpop.permute.xlu0 %425
    %427 = vrot.lane.b32.xlu0 %v43, 101
    %v428 = vpop.permute.xlu0 %427
    %429 = vrot.lane.b32.xlu0 %v44, 101
    %v430 = vpop.permute.xlu0 %429
    %431 = vrot.lane.b32.xlu0 %v45, 101
    %v432 = vpop.permute.xlu0 %431
    %vm433 = vcmask 826368
    %v434 = vsel %vm433, %v416, %v418
    %v435 = vsel %vm433, %v418, %v420
    %v436 = vsel %vm433, %v420, %v422
    %v437 = vsel %vm433, %v422, %v424
    %v438 = vsel %vm433, %v424, %v426
    %v439 = vsel %vm433, %v426, %v428
    %v440 = vsel %vm433, %v428, %v430
    %v441 = vsel %vm433, %v430, %v432
    %442 = vrot.lane.b32.xlu0 %v56, 57
    %v443 = vpop.permute.xlu0 %442
    %444 = vrot.lane.b32.xlu0 %v57, 57
    %v445 = vpop.permute.xlu0 %444
    %446 = vrot.lane.b32.xlu0 %v58, 57
    %v447 = vpop.permute.xlu0 %446
    %448 = vrot.lane.b32.xlu0 %v59, 57
    %v449 = vpop.permute.xlu0 %448
    %450 = vrot.lane.b32.xlu0 %v60, 57
    %v451 = vpop.permute.xlu0 %450
    %452 = vrot.lane.b32.xlu0 %v61, 57
    %v453 = vpop.permute.xlu0 %452
    %454 = vrot.lane.b32.xlu0 %v62, 57
    %v455 = vpop.permute.xlu0 %454
    %456 = vrot.lane.b32.xlu0 %v63, 57
    %v457 = vpop.permute.xlu0 %456
    %458 = vrot.lane.b32.xlu0 %v64, 57
    %v459 = vpop.permute.xlu0 %458
    %vm460 = vcmask 465920
    %v461 = vsel %vm460, %v443, %v445
    %v462 = vsel %vm460, %v445, %v447
    %v463 = vsel %vm460, %v447, %v449
    %v464 = vsel %vm460, %v449, %v451
    %v465 = vsel %vm460, %v451, %v453
    %v466 = vsel %vm460, %v453, %v455
    %v467 = vsel %vm460, %v455, %v457
    %v468 = vsel %vm460, %v457, %v459
    %vm469 = vcmask 1043456
    %v472 = vsel %vm469, %v37, %v84
    %v475 = vsel %vm469, %v38, %v85
    %v478 = vsel %vm469, %v39, %v86
    %v481 = vsel %vm469, %v40, %v87
    %v484 = vsel %vm469, %v41, %v88
    %v487 = vsel %vm469, %v42, %v89
    %v490 = vsel %vm469, %v43, %v90
    %v493 = vsel %vm469, %v44, %v91
    %v496 = vsel %vm469, %v45, %v82
    %v499 = vsel %vm469, %v111, %v138
    %v502 = vsel %vm469, %v112, %v139
    %v505 = vsel %vm469, %v113, %v140
    %v508 = vsel %vm469, %v114, %v141
    %v511 = vsel %vm469, %v115, %v142
    %v514 = vsel %vm469, %v116, %v143
    %v517 = vsel %vm469, %v117, %v144
    %v520 = vsel %vm469, %v118, %v145
    %v523 = vsel %vm469, %v109, %v136
    %v526 = vsel %vm469, %v165, %v192
    %v529 = vsel %vm469, %v166, %v193
    %v532 = vsel %vm469, %v167, %v194
    %v535 = vsel %vm469, %v168, %v195
    %v538 = vsel %vm469, %v169, %v196
    %v541 = vsel %vm469, %v170, %v197
    %v544 = vsel %vm469, %v171, %v198
    %v547 = vsel %vm469, %v172, %v199
    %v550 = vsel %vm469, %v163, %v190
    %v553 = vsel %vm469, %v219, %v246
    %v556 = vsel %vm469, %v220, %v247
    %v559 = vsel %vm469, %v221, %v248
    %v562 = vsel %vm469, %v222, %v249
    %v565 = vsel %vm469, %v223, %v250
    %v568 = vsel %vm469, %v224, %v251
    %v571 = vsel %vm469, %v225, %v252
    %v574 = vsel %vm469, %v226, %v253
    %v577 = vsel %vm469, %v217, %v244
    %v580 = vsel %vm469, %v273, %v282
    %v583 = vsel %vm469, %v274, %v300
    %v586 = vsel %vm469, %v275, %v301
    %v589 = vsel %vm469, %v276, %v302
    %v592 = vsel %vm469, %v277, %v303
    %v595 = vsel %vm469, %v278, %v304
    %v598 = vsel %vm469, %v279, %v305
    %v601 = vsel %vm469, %v280, %v306
    %v604 = vsel %vm469, %v271, %v307
    %v607 = vsel %vm469, %v309, %v336
    %v610 = vsel %vm469, %v327, %v354
    %v613 = vsel %vm469, %v328, %v355
    %v616 = vsel %vm469, %v329, %v356
    %v619 = vsel %vm469, %v330, %v357
    %v622 = vsel %vm469, %v331, %v358
    %v625 = vsel %vm469, %v332, %v359
    %v628 = vsel %vm469, %v333, %v360
    %v631 = vsel %vm469, %v334, %v361
    %v634 = vsel %vm469, %v381, %v407
    %v637 = vsel %vm469, %v382, %v408
    %v640 = vsel %vm469, %v383, %v409
    %v643 = vsel %vm469, %v384, %v410
    %v646 = vsel %vm469, %v385, %v411
    %v649 = vsel %vm469, %v386, %v412
    %v652 = vsel %vm469, %v387, %v413
    %v655 = vsel %vm469, %v388, %v414
    %v658 = vsel %vm469, %v379, %v406
    %v661 = vsel %vm469, %v434, %v461
    %v664 = vsel %vm469, %v435, %v462
    %v667 = vsel %vm469, %v436, %v463
    %v670 = vsel %vm469, %v437, %v464
    %v673 = vsel %vm469, %v438, %v465
    %v676 = vsel %vm469, %v439, %v466
    %v679 = vsel %vm469, %v440, %v467
    %v682 = vsel %vm469, %v441, %v468
    %v685 = vsel %vm469, %v432, %v459
    %686 = vrot.lane.b32.xlu0 %v56, 126
    %v687 = vpop.permute.xlu0 %686
    %688 = vrot.lane.b32.xlu0 %v57, 126
    %v689 = vpop.permute.xlu0 %688
    %690 = vrot.lane.b32.xlu0 %v58, 126
    %v691 = vpop.permute.xlu0 %690
    %692 = vrot.lane.b32.xlu0 %v59, 126
    %v693 = vpop.permute.xlu0 %692
    %694 = vrot.lane.b32.xlu0 %v60, 126
    %v695 = vpop.permute.xlu0 %694
    %696 = vrot.lane.b32.xlu0 %v61, 126
    %v697 = vpop.permute.xlu0 %696
    %698 = vrot.lane.b32.xlu0 %v62, 126
    %v699 = vpop.permute.xlu0 %698
    %700 = vrot.lane.b32.xlu0 %v63, 126
    %v701 = vpop.permute.xlu0 %700
    %702 = vrot.lane.b32.xlu0 %v64, 126
    %v703 = vpop.permute.xlu0 %702
    %v704 = vsel %vm110, %v687, %v689
    %v705 = vsel %vm110, %v689, %v691
    %v706 = vsel %vm110, %v691, %v693
    %v707 = vsel %vm110, %v693, %v695
    %v708 = vsel %vm110, %v695, %v697
    %v709 = vsel %vm110, %v697, %v699
    %v710 = vsel %vm110, %v699, %v701
    %v711 = vsel %vm110, %v701, %v703
    %712 = vrot.lane.b32.xlu0 %v37, 123
    %v713 = vpop.permute.xlu0 %712
    %714 = vrot.lane.b32.xlu0 %v38, 123
    %v715 = vpop.permute.xlu0 %714
    %716 = vrot.lane.b32.xlu0 %v39, 123
    %v717 = vpop.permute.xlu0 %716
    %718 = vrot.lane.b32.xlu0 %v40, 123
    %v719 = vpop.permute.xlu0 %718
    %720 = vrot.lane.b32.xlu0 %v41, 123
    %v721 = vpop.permute.xlu0 %720
    %722 = vrot.lane.b32.xlu0 %v42, 123
    %v723 = vpop.permute.xlu0 %722
    %724 = vrot.lane.b32.xlu0 %v43, 123
    %v725 = vpop.permute.xlu0 %724
    %726 = vrot.lane.b32.xlu0 %v44, 123
    %v727 = vpop.permute.xlu0 %726
    %vm728 = vcmask 1006592
    %v729 = vsel %vm728, %v713, %v715
    %v730 = vsel %vm728, %v715, %v717
    %v731 = vsel %vm728, %v717, %v719
    %v732 = vsel %vm728, %v719, %v721
    %v733 = vsel %vm728, %v721, %v723
    %v734 = vsel %vm728, %v723, %v725
    %v735 = vsel %vm728, %v725, %v727
    %736 = vrot.lane.b32.xlu0 %v56, 120
    %v737 = vpop.permute.xlu0 %736
    %738 = vrot.lane.b32.xlu0 %v57, 120
    %v739 = vpop.permute.xlu0 %738
    %740 = vrot.lane.b32.xlu0 %v58, 120
    %v741 = vpop.permute.xlu0 %740
    %742 = vrot.lane.b32.xlu0 %v59, 120
    %v743 = vpop.permute.xlu0 %742
    %744 = vrot.lane.b32.xlu0 %v60, 120
    %v745 = vpop.permute.xlu0 %744
    %746 = vrot.lane.b32.xlu0 %v61, 120
    %v747 = vpop.permute.xlu0 %746
    %748 = vrot.lane.b32.xlu0 %v62, 120
    %v749 = vpop.permute.xlu0 %748
    %750 = vrot.lane.b32.xlu0 %v63, 120
    %v751 = vpop.permute.xlu0 %750
    %752 = vrot.lane.b32.xlu0 %v64, 120
    %v753 = vpop.permute.xlu0 %752
    %vm754 = vcmask 982016
    %v755 = vsel %vm754, %v737, %v739
    %v756 = vsel %vm754, %v739, %v741
    %v757 = vsel %vm754, %v741, %v743
    %v758 = vsel %vm754, %v743, %v745
    %v759 = vsel %vm754, %v745, %v747
    %v760 = vsel %vm754, %v747, %v749
    %v761 = vsel %vm754, %v749, %v751
    %v762 = vsel %vm754, %v751, %v753
    %763 = vrot.lane.b32.xlu0 %v37, 117
    %v764 = vpop.permute.xlu0 %763
    %765 = vrot.lane.b32.xlu0 %v38, 117
    %v766 = vpop.permute.xlu0 %765
    %767 = vrot.lane.b32.xlu0 %v39, 117
    %v768 = vpop.permute.xlu0 %767
    %769 = vrot.lane.b32.xlu0 %v40, 117
    %v770 = vpop.permute.xlu0 %769
    %771 = vrot.lane.b32.xlu0 %v41, 117
    %v772 = vpop.permute.xlu0 %771
    %773 = vrot.lane.b32.xlu0 %v42, 117
    %v774 = vpop.permute.xlu0 %773
    %775 = vrot.lane.b32.xlu0 %v43, 117
    %v776 = vpop.permute.xlu0 %775
    %777 = vrot.lane.b32.xlu0 %v44, 117
    %v778 = vpop.permute.xlu0 %777
    %779 = vrot.lane.b32.xlu0 %v45, 117
    %v780 = vpop.permute.xlu0 %779
    %vm781 = vcmask 957440
    %v782 = vsel %vm781, %v764, %v766
    %v783 = vsel %vm781, %v766, %v768
    %v784 = vsel %vm781, %v768, %v770
    %v785 = vsel %vm781, %v770, %v772
    %v786 = vsel %vm781, %v772, %v774
    %v787 = vsel %vm781, %v774, %v776
    %v788 = vsel %vm781, %v776, %v778
    %v789 = vsel %vm781, %v778, %v780
    %790 = vrot.lane.b32.xlu0 %v56, 51
    %v791 = vpop.permute.xlu0 %790
    %792 = vrot.lane.b32.xlu0 %v57, 51
    %v793 = vpop.permute.xlu0 %792
    %794 = vrot.lane.b32.xlu0 %v58, 51
    %v795 = vpop.permute.xlu0 %794
    %796 = vrot.lane.b32.xlu0 %v59, 51
    %v797 = vpop.permute.xlu0 %796
    %798 = vrot.lane.b32.xlu0 %v60, 51
    %v799 = vpop.permute.xlu0 %798
    %800 = vrot.lane.b32.xlu0 %v61, 51
    %v801 = vpop.permute.xlu0 %800
    %802 = vrot.lane.b32.xlu0 %v62, 51
    %v803 = vpop.permute.xlu0 %802
    %804 = vrot.lane.b32.xlu0 %v63, 51
    %v805 = vpop.permute.xlu0 %804
    %806 = vrot.lane.b32.xlu0 %v64, 51
    %v807 = vpop.permute.xlu0 %806
    %vm808 = vcmask 416768
    %v809 = vsel %vm808, %v791, %v793
    %v810 = vsel %vm808, %v793, %v795
    %v811 = vsel %vm808, %v795, %v797
    %v812 = vsel %vm808, %v797, %v799
    %v813 = vsel %vm808, %v799, %v801
    %v814 = vsel %vm808, %v801, %v803
    %v815 = vsel %vm808, %v803, %v805
    %v816 = vsel %vm808, %v805, %v807
    %817 = vrot.lane.b32.xlu0 %v37, 48
    %v818 = vpop.permute.xlu0 %817
    %819 = vrot.lane.b32.xlu0 %v38, 48
    %v820 = vpop.permute.xlu0 %819
    %821 = vrot.lane.b32.xlu0 %v39, 48
    %v822 = vpop.permute.xlu0 %821
    %823 = vrot.lane.b32.xlu0 %v40, 48
    %v824 = vpop.permute.xlu0 %823
    %825 = vrot.lane.b32.xlu0 %v41, 48
    %v826 = vpop.permute.xlu0 %825
    %827 = vrot.lane.b32.xlu0 %v42, 48
    %v828 = vpop.permute.xlu0 %827
    %829 = vrot.lane.b32.xlu0 %v43, 48
    %v830 = vpop.permute.xlu0 %829
    %831 = vrot.lane.b32.xlu0 %v44, 48
    %v832 = vpop.permute.xlu0 %831
    %833 = vrot.lane.b32.xlu0 %v45, 48
    %v834 = vpop.permute.xlu0 %833
    %vm835 = vcmask 392192
    %v836 = vsel %vm835, %v818, %v820
    %v837 = vsel %vm835, %v820, %v822
    %v838 = vsel %vm835, %v822, %v824
    %v839 = vsel %vm835, %v824, %v826
    %v840 = vsel %vm835, %v826, %v828
    %v841 = vsel %vm835, %v828, %v830
    %v842 = vsel %vm835, %v830, %v832
    %v843 = vsel %vm835, %v832, %v834
    %844 = vrot.lane.b32.xlu0 %v56, 45
    %v845 = vpop.permute.xlu0 %844
    %846 = vrot.lane.b32.xlu0 %v57, 45
    %v847 = vpop.permute.xlu0 %846
    %848 = vrot.lane.b32.xlu0 %v58, 45
    %v849 = vpop.permute.xlu0 %848
    %850 = vrot.lane.b32.xlu0 %v59, 45
    %v851 = vpop.permute.xlu0 %850
    %852 = vrot.lane.b32.xlu0 %v60, 45
    %v853 = vpop.permute.xlu0 %852
    %854 = vrot.lane.b32.xlu0 %v61, 45
    %v855 = vpop.permute.xlu0 %854
    %856 = vrot.lane.b32.xlu0 %v62, 45
    %v857 = vpop.permute.xlu0 %856
    %858 = vrot.lane.b32.xlu0 %v63, 45
    %v859 = vpop.permute.xlu0 %858
    %860 = vrot.lane.b32.xlu0 %v64, 45
    %v861 = vpop.permute.xlu0 %860
    %vm862 = vcmask 367616
    %v863 = vsel %vm862, %v845, %v847
    %v864 = vsel %vm862, %v847, %v849
    %v865 = vsel %vm862, %v849, %v851
    %v866 = vsel %vm862, %v851, %v853
    %v867 = vsel %vm862, %v853, %v855
    %v868 = vsel %vm862, %v855, %v857
    %v869 = vsel %vm862, %v857, %v859
    %v870 = vsel %vm862, %v859, %v861
    %872 = vrot.lane.b32.xlu0 %v38, 107
    %v873 = vpop.permute.xlu0 %872
    %874 = vrot.lane.b32.xlu0 %v39, 107
    %v875 = vpop.permute.xlu0 %874
    %876 = vrot.lane.b32.xlu0 %v40, 107
    %v877 = vpop.permute.xlu0 %876
    %878 = vrot.lane.b32.xlu0 %v41, 107
    %v879 = vpop.permute.xlu0 %878
    %880 = vrot.lane.b32.xlu0 %v42, 107
    %v881 = vpop.permute.xlu0 %880
    %882 = vrot.lane.b32.xlu0 %v43, 107
    %v883 = vpop.permute.xlu0 %882
    %884 = vrot.lane.b32.xlu0 %v44, 107
    %v885 = vpop.permute.xlu0 %884
    %886 = vrot.lane.b32.xlu0 %v45, 107
    %v887 = vpop.permute.xlu0 %886
    %888 = vrot.lane.b32.xlu0 %v46, 107
    %v889 = vpop.permute.xlu0 %888
    %vm890 = vcmask 875520
    %v891 = vsel %vm890, %v873, %v875
    %v892 = vsel %vm890, %v875, %v877
    %v893 = vsel %vm890, %v877, %v879
    %v894 = vsel %vm890, %v879, %v881
    %v895 = vsel %vm890, %v881, %v883
    %v896 = vsel %vm890, %v883, %v885
    %v897 = vsel %vm890, %v885, %v887
    %v898 = vsel %vm890, %v887, %v889
    %v899 = vrot.slane %v46, 4
    %900 = vrot.lane.b32.xlu0 %v899, 104
    %v901 = vpop.permute.xlu0 %900
    %v902 = vsel %vm137, %v136, %v901
    %903 = vrot.lane.b32.xlu0 %v46, 101
    %v904 = vpop.permute.xlu0 %903
    %v905 = vsel %vm433, %v432, %v904
    %v907 = vsel %vm469, %v37, %v704
    %v909 = vsel %vm469, %v38, %v705
    %v911 = vsel %vm469, %v39, %v706
    %v913 = vsel %vm469, %v40, %v707
    %v915 = vsel %vm469, %v41, %v708
    %v917 = vsel %vm469, %v42, %v709
    %v919 = vsel %vm469, %v43, %v710
    %v921 = vsel %vm469, %v44, %v711
    %v923 = vsel %vm469, %v45, %v703
    %v926 = vsel %vm469, %v713, %v737
    %v929 = vsel %vm469, %v729, %v755
    %v932 = vsel %vm469, %v730, %v756
    %v935 = vsel %vm469, %v731, %v757
    %v938 = vsel %vm469, %v732, %v758
    %v941 = vsel %vm469, %v733, %v759
    %v944 = vsel %vm469, %v734, %v760
    %v947 = vsel %vm469, %v735, %v761
    %v950 = vsel %vm469, %v727, %v762
    %v953 = vsel %vm469, %v764, %v791
    %v956 = vsel %vm469, %v782, %v809
    %v959 = vsel %vm469, %v783, %v810
    %v962 = vsel %vm469, %v784, %v811
    %v965 = vsel %vm469, %v785, %v812
    %v968 = vsel %vm469, %v786, %v813
    %v971 = vsel %vm469, %v787, %v814
    %v974 = vsel %vm469, %v788, %v815
    %v977 = vsel %vm469, %v789, %v816
    %v980 = vsel %vm469, %v818, %v845
    %v983 = vsel %vm469, %v836, %v863
    %v986 = vsel %vm469, %v837, %v864
    %v989 = vsel %vm469, %v838, %v865
    %v992 = vsel %vm469, %v839, %v866
    %v995 = vsel %vm469, %v840, %v867
    %v998 = vsel %vm469, %v841, %v868
    %v1001 = vsel %vm469, %v842, %v869
    %v1004 = vsel %vm469, %v843, %v870
    %v1007 = vsel %vm469, %v873, %v122
    %v1009 = vsel %vm469, %v891, %v139
    %v1011 = vsel %vm469, %v892, %v140
    %v1013 = vsel %vm469, %v893, %v141
    %v1015 = vsel %vm469, %v894, %v142
    %v1017 = vsel %vm469, %v895, %v143
    %v1019 = vsel %vm469, %v896, %v144
    %v1021 = vsel %vm469, %v897, %v145
    %v1024 = vsel %vm469, %v898, %v902
    %1070 = vrot.lane.b32.xlu0 %v907, 55
    %v1071 = vpop.permute.xlu0 %1070
    %1072 = vrot.lane.b32.xlu0 %v909, 55
    %v1073 = vpop.permute.xlu0 %1072
    %1074 = vrot.lane.b32.xlu0 %v911, 55
    %v1075 = vpop.permute.xlu0 %1074
    %1076 = vrot.lane.b32.xlu0 %v913, 55
    %v1077 = vpop.permute.xlu0 %1076
    %1078 = vrot.lane.b32.xlu0 %v915, 55
    %v1079 = vpop.permute.xlu0 %1078
    %1080 = vrot.lane.b32.xlu0 %v917, 55
    %v1081 = vpop.permute.xlu0 %1080
    %1082 = vrot.lane.b32.xlu0 %v919, 55
    %v1083 = vpop.permute.xlu0 %1082
    %1084 = vrot.lane.b32.xlu0 %v921, 55
    %v1085 = vpop.permute.xlu0 %1084
    %1086 = vrot.lane.b32.xlu0 %v923, 55
    %v1087 = vpop.permute.xlu0 %1086
    %1088 = vrot.lane.b32.xlu0 %v926, 55
    %v1089 = vpop.permute.xlu0 %1088
    %1090 = vrot.lane.b32.xlu0 %v929, 55
    %v1091 = vpop.permute.xlu0 %1090
    %1092 = vrot.lane.b32.xlu0 %v932, 55
    %v1093 = vpop.permute.xlu0 %1092
    %1094 = vrot.lane.b32.xlu0 %v935, 55
    %v1095 = vpop.permute.xlu0 %1094
    %1096 = vrot.lane.b32.xlu0 %v938, 55
    %v1097 = vpop.permute.xlu0 %1096
    %1098 = vrot.lane.b32.xlu0 %v941, 55
    %v1099 = vpop.permute.xlu0 %1098
    %1100 = vrot.lane.b32.xlu0 %v944, 55
    %v1101 = vpop.permute.xlu0 %1100
    %1102 = vrot.lane.b32.xlu0 %v947, 55
    %v1103 = vpop.permute.xlu0 %1102
    %1104 = vrot.lane.b32.xlu0 %v950, 55
    %v1105 = vpop.permute.xlu0 %1104
    %1106 = vrot.lane.b32.xlu0 %v953, 55
    %v1107 = vpop.permute.xlu0 %1106
    %1108 = vrot.lane.b32.xlu0 %v956, 55
    %v1109 = vpop.permute.xlu0 %1108
    %1110 = vrot.lane.b32.xlu0 %v959, 55
    %v1111 = vpop.permute.xlu0 %1110
    %1112 = vrot.lane.b32.xlu0 %v962, 55
    %v1113 = vpop.permute.xlu0 %1112
    %1114 = vrot.lane.b32.xlu0 %v965, 55
    %v1115 = vpop.permute.xlu0 %1114
    %1116 = vrot.lane.b32.xlu0 %v968, 55
    %v1117 = vpop.permute.xlu0 %1116
    %1118 = vrot.lane.b32.xlu0 %v971, 55
    %v1119 = vpop.permute.xlu0 %1118
    %1120 = vrot.lane.b32.xlu0 %v974, 55
    %v1121 = vpop.permute.xlu0 %1120
    %1122 = vrot.lane.b32.xlu0 %v977, 55
    %v1123 = vpop.permute.xlu0 %1122
    %1124 = vrot.lane.b32.xlu0 %v980, 55
    %v1125 = vpop.permute.xlu0 %1124
    %1126 = vrot.lane.b32.xlu0 %v983, 55
    %v1127 = vpop.permute.xlu0 %1126
    %1128 = vrot.lane.b32.xlu0 %v986, 55
    %v1129 = vpop.permute.xlu0 %1128
    %1130 = vrot.lane.b32.xlu0 %v989, 55
    %v1131 = vpop.permute.xlu0 %1130
    %1132 = vrot.lane.b32.xlu0 %v992, 55
    %v1133 = vpop.permute.xlu0 %1132
    %1134 = vrot.lane.b32.xlu0 %v995, 55
    %v1135 = vpop.permute.xlu0 %1134
    %1136 = vrot.lane.b32.xlu0 %v998, 55
    %v1137 = vpop.permute.xlu0 %1136
    %1138 = vrot.lane.b32.xlu0 %v1001, 55
    %v1139 = vpop.permute.xlu0 %1138
    %1140 = vrot.lane.b32.xlu0 %v1004, 55
    %v1141 = vpop.permute.xlu0 %1140
    %1142 = vrot.lane.b32.xlu0 %v1007, 55
    %v1143 = vpop.permute.xlu0 %1142
    %1144 = vrot.lane.b32.xlu0 %v1009, 55
    %v1145 = vpop.permute.xlu0 %1144
    %1146 = vrot.lane.b32.xlu0 %v1011, 55
    %v1147 = vpop.permute.xlu0 %1146
    %1148 = vrot.lane.b32.xlu0 %v1013, 55
    %v1149 = vpop.permute.xlu0 %1148
    %1150 = vrot.lane.b32.xlu0 %v1015, 55
    %v1151 = vpop.permute.xlu0 %1150
    %1152 = vrot.lane.b32.xlu0 %v1017, 55
    %v1153 = vpop.permute.xlu0 %1152
    %1154 = vrot.lane.b32.xlu0 %v1019, 55
    %v1155 = vpop.permute.xlu0 %1154
    %1156 = vrot.lane.b32.xlu0 %v1021, 55
    %v1157 = vpop.permute.xlu0 %1156
    %1158 = vrot.lane.b32.xlu0 %v1024, 55
    %v1159 = vpop.permute.xlu0 %1158
    %1160 = vrot.lane.b32.xlu0 %v418, 55
    %v1161 = vpop.permute.xlu0 %1160
    %1162 = vrot.lane.b32.xlu0 %v435, 55
    %v1163 = vpop.permute.xlu0 %1162
    %1164 = vrot.lane.b32.xlu0 %v436, 55
    %v1165 = vpop.permute.xlu0 %1164
    %1166 = vrot.lane.b32.xlu0 %v437, 55
    %v1167 = vpop.permute.xlu0 %1166
    %1168 = vrot.lane.b32.xlu0 %v438, 55
    %v1169 = vpop.permute.xlu0 %1168
    %1170 = vrot.lane.b32.xlu0 %v439, 55
    %v1171 = vpop.permute.xlu0 %1170
    %1172 = vrot.lane.b32.xlu0 %v440, 55
    %v1173 = vpop.permute.xlu0 %1172
    %1174 = vrot.lane.b32.xlu0 %v441, 55
    %v1175 = vpop.permute.xlu0 %1174
    %1176 = vrot.lane.b32.xlu0 %v905, 55
    %v1177 = vpop.permute.xlu0 %1176
    %vm1178 = vcmask 449536
    %v1179 = vsel %vm1178, %v1071, %v1073
    %v1180 = vsel %vm1178, %v1073, %v1075
    %v1181 = vsel %vm1178, %v1075, %v1077
    %v1182 = vsel %vm1178, %v1077, %v1079
    %v1183 = vsel %vm1178, %v1079, %v1081
    %v1184 = vsel %vm1178, %v1081, %v1083
    %v1185 = vsel %vm1178, %v1083, %v1085
    %v1186 = vsel %vm1178, %v1085, %v1087
    %v1187 = vsel %vm1178, %v1089, %v1091
    %v1188 = vsel %vm1178, %v1091, %v1093
    %v1189 = vsel %vm1178, %v1093, %v1095
    %v1190 = vsel %vm1178, %v1095, %v1097
    %v1191 = vsel %vm1178, %v1097, %v1099
    %v1192 = vsel %vm1178, %v1099, %v1101
    %v1193 = vsel %vm1178, %v1101, %v1103
    %v1194 = vsel %vm1178, %v1103, %v1105
    %v1195 = vsel %vm1178, %v1107, %v1109
    %v1196 = vsel %vm1178, %v1109, %v1111
    %v1197 = vsel %vm1178, %v1111, %v1113
    %v1198 = vsel %vm1178, %v1113, %v1115
    %v1199 = vsel %vm1178, %v1115, %v1117
    %v1200 = vsel %vm1178, %v1117, %v1119
    %v1201 = vsel %vm1178, %v1119, %v1121
    %v1202 = vsel %vm1178, %v1121, %v1123
    %v1203 = vsel %vm1178, %v1125, %v1127
    %v1204 = vsel %vm1178, %v1127, %v1129
    %v1205 = vsel %vm1178, %v1129, %v1131
    %v1206 = vsel %vm1178, %v1131, %v1133
    %v1207 = vsel %vm1178, %v1133, %v1135
    %v1208 = vsel %vm1178, %v1135, %v1137
    %v1209 = vsel %vm1178, %v1137, %v1139
    %v1210 = vsel %vm1178, %v1139, %v1141
    %v1211 = vsel %vm1178, %v1143, %v1145
    %v1212 = vsel %vm1178, %v1145, %v1147
    %v1213 = vsel %vm1178, %v1147, %v1149
    %v1214 = vsel %vm1178, %v1149, %v1151
    %v1215 = vsel %vm1178, %v1151, %v1153
    %v1216 = vsel %vm1178, %v1153, %v1155
    %v1217 = vsel %vm1178, %v1155, %v1157
    %v1218 = vsel %vm1178, %v1157, %v1159
    %v1219 = vsel %vm1178, %v1161, %v1163
    %v1220 = vsel %vm1178, %v1163, %v1165
    %v1221 = vsel %vm1178, %v1165, %v1167
    %v1222 = vsel %vm1178, %v1167, %v1169
    %v1223 = vsel %vm1178, %v1169, %v1171
    %v1224 = vsel %vm1178, %v1171, %v1173
    %v1225 = vsel %vm1178, %v1173, %v1175
    %v1226 = vsel %vm1178, %v1175, %v1177
    %v1227 = vld [vmem:[%s1] sm:$0xff]
    %v1228 = vld [vmem:[%s1 + $0x8] sm:$0x33]
    %v1229 = vld [vmem:[%s2] sm:$0xff]
    %v1230 = vld [vmem:[%s2 + $0x8] sm:$0xf]
    %1232 = vset.pattern.permute.xlu0 0
    %1233 = vperm.xlu0 %1232, %v1229
    %v1234 = vpop.permute.xlu0 %1233
    %1237 = vset.pattern.permute.xlu0 0
    %1238 = vperm.xlu0 %1237, %v1230
    %v1239 = vpop.permute.xlu0 %1238
    %v1243 = vunpack.c.l.b16 %v1227
    %v1244 = vunpack.c.h.b16 %v1227
    %v1245 = vunpack.c.l.b16 %v1228
    %v1246 = vunpack.c.h.b16 %v1228
    %v1247 = vpack.c.b16 %v1245, %v1243
    %v1248 = vpack.c.b16 %v1246, %v1244
    %1322 = vrot.lane.b32.xlu0 %v472, 78
    %v1323 = vpop.permute.xlu0 %1322
    %1324 = vrot.lane.b32.xlu0 %v475, 78
    %v1325 = vpop.permute.xlu0 %1324
    %1326 = vrot.lane.b32.xlu0 %v478, 78
    %v1327 = vpop.permute.xlu0 %1326
    %1328 = vrot.lane.b32.xlu0 %v481, 78
    %v1329 = vpop.permute.xlu0 %1328
    %1330 = vrot.lane.b32.xlu0 %v484, 78
    %v1331 = vpop.permute.xlu0 %1330
    %1332 = vrot.lane.b32.xlu0 %v487, 78
    %v1333 = vpop.permute.xlu0 %1332
    %1334 = vrot.lane.b32.xlu0 %v490, 78
    %v1335 = vpop.permute.xlu0 %1334
    %1336 = vrot.lane.b32.xlu0 %v493, 78
    %v1337 = vpop.permute.xlu0 %1336
    %1338 = vrot.lane.b32.xlu0 %v496, 78
    %v1339 = vpop.permute.xlu0 %1338
    %1340 = vrot.lane.b32.xlu0 %v499, 78
    %v1341 = vpop.permute.xlu0 %1340
    %1342 = vrot.lane.b32.xlu0 %v502, 78
    %v1343 = vpop.permute.xlu0 %1342
    %1344 = vrot.lane.b32.xlu0 %v505, 78
    %v1345 = vpop.permute.xlu0 %1344
    %1346 = vrot.lane.b32.xlu0 %v508, 78
    %v1347 = vpop.permute.xlu0 %1346
    %1348 = vrot.lane.b32.xlu0 %v511, 78
    %v1349 = vpop.permute.xlu0 %1348
    %1350 = vrot.lane.b32.xlu0 %v514, 78
    %v1351 = vpop.permute.xlu0 %1350
    %1352 = vrot.lane.b32.xlu0 %v517, 78
    %v1353 = vpop.permute.xlu0 %1352
    %1354 = vrot.lane.b32.xlu0 %v520, 78
    %v1355 = vpop.permute.xlu0 %1354
    %1356 = vrot.lane.b32.xlu0 %v523, 78
    %v1357 = vpop.permute.xlu0 %1356
    %1358 = vrot.lane.b32.xlu0 %v526, 78
    %v1359 = vpop.permute.xlu0 %1358
    %1360 = vrot.lane.b32.xlu0 %v529, 78
    %v1361 = vpop.permute.xlu0 %1360
    %1362 = vrot.lane.b32.xlu0 %v532, 78
    %v1363 = vpop.permute.xlu0 %1362
    %1364 = vrot.lane.b32.xlu0 %v535, 78
    %v1365 = vpop.permute.xlu0 %1364
    %1366 = vrot.lane.b32.xlu0 %v538, 78
    %v1367 = vpop.permute.xlu0 %1366
    %1368 = vrot.lane.b32.xlu0 %v541, 78
    %v1369 = vpop.permute.xlu0 %1368
    %1370 = vrot.lane.b32.xlu0 %v544, 78
    %v1371 = vpop.permute.xlu0 %1370
    %1372 = vrot.lane.b32.xlu0 %v547, 78
    %v1373 = vpop.permute.xlu0 %1372
    %1374 = vrot.lane.b32.xlu0 %v550, 78
    %v1375 = vpop.permute.xlu0 %1374
    %1376 = vrot.lane.b32.xlu0 %v553, 78
    %v1377 = vpop.permute.xlu0 %1376
    %1378 = vrot.lane.b32.xlu0 %v556, 78
    %v1379 = vpop.permute.xlu0 %1378
    %1380 = vrot.lane.b32.xlu0 %v559, 78
    %v1381 = vpop.permute.xlu0 %1380
    %1382 = vrot.lane.b32.xlu0 %v562, 78
    %v1383 = vpop.permute.xlu0 %1382
    %1384 = vrot.lane.b32.xlu0 %v565, 78
    %v1385 = vpop.permute.xlu0 %1384
    %1386 = vrot.lane.b32.xlu0 %v568, 78
    %v1387 = vpop.permute.xlu0 %1386
    %1388 = vrot.lane.b32.xlu0 %v571, 78
    %v1389 = vpop.permute.xlu0 %1388
    %1390 = vrot.lane.b32.xlu0 %v574, 78
    %v1391 = vpop.permute.xlu0 %1390
    %1392 = vrot.lane.b32.xlu0 %v577, 78
    %v1393 = vpop.permute.xlu0 %1392
    %1394 = vrot.lane.b32.xlu0 %v580, 78
    %v1395 = vpop.permute.xlu0 %1394
    %1396 = vrot.lane.b32.xlu0 %v583, 78
    %v1397 = vpop.permute.xlu0 %1396
    %1398 = vrot.lane.b32.xlu0 %v586, 78
    %v1399 = vpop.permute.xlu0 %1398
    %1400 = vrot.lane.b32.xlu0 %v589, 78
    %v1401 = vpop.permute.xlu0 %1400
    %1402 = vrot.lane.b32.xlu0 %v592, 78
    %v1403 = vpop.permute.xlu0 %1402
    %1404 = vrot.lane.b32.xlu0 %v595, 78
    %v1405 = vpop.permute.xlu0 %1404
    %1406 = vrot.lane.b32.xlu0 %v598, 78
    %v1407 = vpop.permute.xlu0 %1406
    %1408 = vrot.lane.b32.xlu0 %v601, 78
    %v1409 = vpop.permute.xlu0 %1408
    %1410 = vrot.lane.b32.xlu0 %v604, 78
    %v1411 = vpop.permute.xlu0 %1410
    %1412 = vrot.lane.b32.xlu0 %v607, 78
    %v1413 = vpop.permute.xlu0 %1412
    %1414 = vrot.lane.b32.xlu0 %v610, 78
    %v1415 = vpop.permute.xlu0 %1414
    %1416 = vrot.lane.b32.xlu0 %v613, 78
    %v1417 = vpop.permute.xlu0 %1416
    %1418 = vrot.lane.b32.xlu0 %v616, 78
    %v1419 = vpop.permute.xlu0 %1418
    %1420 = vrot.lane.b32.xlu0 %v619, 78
    %v1421 = vpop.permute.xlu0 %1420
    %1422 = vrot.lane.b32.xlu0 %v622, 78
    %v1423 = vpop.permute.xlu0 %1422
    %1424 = vrot.lane.b32.xlu0 %v625, 78
    %v1425 = vpop.permute.xlu0 %1424
    %1426 = vrot.lane.b32.xlu0 %v628, 78
    %v1427 = vpop.permute.xlu0 %1426
    %1428 = vrot.lane.b32.xlu0 %v631, 78
    %v1429 = vpop.permute.xlu0 %1428
    %1430 = vrot.lane.b32.xlu0 %v634, 78
    %v1431 = vpop.permute.xlu0 %1430
    %1432 = vrot.lane.b32.xlu0 %v637, 78
    %v1433 = vpop.permute.xlu0 %1432
    %1434 = vrot.lane.b32.xlu0 %v640, 78
    %v1435 = vpop.permute.xlu0 %1434
    %1436 = vrot.lane.b32.xlu0 %v643, 78
    %v1437 = vpop.permute.xlu0 %1436
    %1438 = vrot.lane.b32.xlu0 %v646, 78
    %v1439 = vpop.permute.xlu0 %1438
    %1440 = vrot.lane.b32.xlu0 %v649, 78
    %v1441 = vpop.permute.xlu0 %1440
    %1442 = vrot.lane.b32.xlu0 %v652, 78
    %v1443 = vpop.permute.xlu0 %1442
    %1444 = vrot.lane.b32.xlu0 %v655, 78
    %v1445 = vpop.permute.xlu0 %1444
    %1446 = vrot.lane.b32.xlu0 %v658, 78
    %v1447 = vpop.permute.xlu0 %1446
    %1448 = vrot.lane.b32.xlu0 %v661, 78
    %v1449 = vpop.permute.xlu0 %1448
    %1450 = vrot.lane.b32.xlu0 %v664, 78
    %v1451 = vpop.permute.xlu0 %1450
    %1452 = vrot.lane.b32.xlu0 %v667, 78
    %v1453 = vpop.permute.xlu0 %1452
    %1454 = vrot.lane.b32.xlu0 %v670, 78
    %v1455 = vpop.permute.xlu0 %1454
    %1456 = vrot.lane.b32.xlu0 %v673, 78
    %v1457 = vpop.permute.xlu0 %1456
    %1458 = vrot.lane.b32.xlu0 %v676, 78
    %v1459 = vpop.permute.xlu0 %1458
    %1460 = vrot.lane.b32.xlu0 %v679, 78
    %v1461 = vpop.permute.xlu0 %1460
    %1462 = vrot.lane.b32.xlu0 %v682, 78
    %v1463 = vpop.permute.xlu0 %1462
    %1464 = vrot.lane.b32.xlu0 %v685, 78
    %v1465 = vpop.permute.xlu0 %1464
    %1466 = vrot.lane.b32.xlu0 %v1179, 78
    %v1467 = vpop.permute.xlu0 %1466
    %1468 = vrot.lane.b32.xlu0 %v1180, 78
    %v1469 = vpop.permute.xlu0 %1468
    %1470 = vrot.lane.b32.xlu0 %v1181, 78
    %v1471 = vpop.permute.xlu0 %1470
    %1472 = vrot.lane.b32.xlu0 %v1182, 78
    %v1473 = vpop.permute.xlu0 %1472
    %1474 = vrot.lane.b32.xlu0 %v1183, 78
    %v1475 = vpop.permute.xlu0 %1474
    %1476 = vrot.lane.b32.xlu0 %v1184, 78
    %v1477 = vpop.permute.xlu0 %1476
    %1478 = vrot.lane.b32.xlu0 %v1185, 78
    %v1479 = vpop.permute.xlu0 %1478
    %1480 = vrot.lane.b32.xlu0 %v1186, 78
    %v1481 = vpop.permute.xlu0 %1480
    %1482 = vrot.lane.b32.xlu0 %v1087, 78
    %v1483 = vpop.permute.xlu0 %1482
    %1484 = vrot.lane.b32.xlu0 %v1187, 78
    %v1485 = vpop.permute.xlu0 %1484
    %1486 = vrot.lane.b32.xlu0 %v1188, 78
    %v1487 = vpop.permute.xlu0 %1486
    %1488 = vrot.lane.b32.xlu0 %v1189, 78
    %v1489 = vpop.permute.xlu0 %1488
    %1490 = vrot.lane.b32.xlu0 %v1190, 78
    %v1491 = vpop.permute.xlu0 %1490
    %1492 = vrot.lane.b32.xlu0 %v1191, 78
    %v1493 = vpop.permute.xlu0 %1492
    %1494 = vrot.lane.b32.xlu0 %v1192, 78
    %v1495 = vpop.permute.xlu0 %1494
    %1496 = vrot.lane.b32.xlu0 %v1193, 78
    %v1497 = vpop.permute.xlu0 %1496
    %1498 = vrot.lane.b32.xlu0 %v1194, 78
    %v1499 = vpop.permute.xlu0 %1498
    %1500 = vrot.lane.b32.xlu0 %v1105, 78
    %v1501 = vpop.permute.xlu0 %1500
    %1502 = vrot.lane.b32.xlu0 %v1195, 78
    %v1503 = vpop.permute.xlu0 %1502
    %1504 = vrot.lane.b32.xlu0 %v1196, 78
    %v1505 = vpop.permute.xlu0 %1504
    %1506 = vrot.lane.b32.xlu0 %v1197, 78
    %v1507 = vpop.permute.xlu0 %1506
    %1508 = vrot.lane.b32.xlu0 %v1198, 78
    %v1509 = vpop.permute.xlu0 %1508
    %1510 = vrot.lane.b32.xlu0 %v1199, 78
    %v1511 = vpop.permute.xlu0 %1510
    %1512 = vrot.lane.b32.xlu0 %v1200, 78
    %v1513 = vpop.permute.xlu0 %1512
    %1514 = vrot.lane.b32.xlu0 %v1201, 78
    %v1515 = vpop.permute.xlu0 %1514
    %1516 = vrot.lane.b32.xlu0 %v1202, 78
    %v1517 = vpop.permute.xlu0 %1516
    %1518 = vrot.lane.b32.xlu0 %v1123, 78
    %v1519 = vpop.permute.xlu0 %1518
    %1520 = vrot.lane.b32.xlu0 %v1203, 78
    %v1521 = vpop.permute.xlu0 %1520
    %1522 = vrot.lane.b32.xlu0 %v1204, 78
    %v1523 = vpop.permute.xlu0 %1522
    %1524 = vrot.lane.b32.xlu0 %v1205, 78
    %v1525 = vpop.permute.xlu0 %1524
    %1526 = vrot.lane.b32.xlu0 %v1206, 78
    %v1527 = vpop.permute.xlu0 %1526
    %1528 = vrot.lane.b32.xlu0 %v1207, 78
    %v1529 = vpop.permute.xlu0 %1528
    %1530 = vrot.lane.b32.xlu0 %v1208, 78
    %v1531 = vpop.permute.xlu0 %1530
    %1532 = vrot.lane.b32.xlu0 %v1209, 78
    %v1533 = vpop.permute.xlu0 %1532
    %1534 = vrot.lane.b32.xlu0 %v1210, 78
    %v1535 = vpop.permute.xlu0 %1534
    %1536 = vrot.lane.b32.xlu0 %v1141, 78
    %v1537 = vpop.permute.xlu0 %1536
    %1538 = vrot.lane.b32.xlu0 %v1211, 78
    %v1539 = vpop.permute.xlu0 %1538
    %1540 = vrot.lane.b32.xlu0 %v1212, 78
    %v1541 = vpop.permute.xlu0 %1540
    %1542 = vrot.lane.b32.xlu0 %v1213, 78
    %v1543 = vpop.permute.xlu0 %1542
    %1544 = vrot.lane.b32.xlu0 %v1214, 78
    %v1545 = vpop.permute.xlu0 %1544
    %1546 = vrot.lane.b32.xlu0 %v1215, 78
    %v1547 = vpop.permute.xlu0 %1546
    %1548 = vrot.lane.b32.xlu0 %v1216, 78
    %v1549 = vpop.permute.xlu0 %1548
    %1550 = vrot.lane.b32.xlu0 %v1217, 78
    %v1551 = vpop.permute.xlu0 %1550
    %1552 = vrot.lane.b32.xlu0 %v1218, 78
    %v1553 = vpop.permute.xlu0 %1552
    %1554 = vrot.lane.b32.xlu0 %v1159, 78
    %v1555 = vpop.permute.xlu0 %1554
    %1556 = vrot.lane.b32.xlu0 %v1219, 78
    %v1557 = vpop.permute.xlu0 %1556
    %1558 = vrot.lane.b32.xlu0 %v1220, 78
    %v1559 = vpop.permute.xlu0 %1558
    %1560 = vrot.lane.b32.xlu0 %v1221, 78
    %v1561 = vpop.permute.xlu0 %1560
    %1562 = vrot.lane.b32.xlu0 %v1222, 78
    %v1563 = vpop.permute.xlu0 %1562
    %1564 = vrot.lane.b32.xlu0 %v1223, 78
    %v1565 = vpop.permute.xlu0 %1564
    %1566 = vrot.lane.b32.xlu0 %v1224, 78
    %v1567 = vpop.permute.xlu0 %1566
    %1568 = vrot.lane.b32.xlu0 %v1225, 78
    %v1569 = vpop.permute.xlu0 %1568
    %1570 = vrot.lane.b32.xlu0 %v1226, 78
    %v1571 = vpop.permute.xlu0 %1570
    %1572 = vrot.lane.b32.xlu0 %v1177, 78
    %v1573 = vpop.permute.xlu0 %1572
    %v1574 = vsel %vm272, %v1323, %v1325
    %v1575 = vsel %vm272, %v1325, %v1327
    %v1576 = vsel %vm272, %v1327, %v1329
    %v1577 = vsel %vm272, %v1329, %v1331
    %v1578 = vsel %vm272, %v1331, %v1333
    %v1579 = vsel %vm272, %v1333, %v1335
    %v1580 = vsel %vm272, %v1335, %v1337
    %v1581 = vsel %vm272, %v1337, %v1339
    %v1582 = vsel %vm272, %v1341, %v1343
    %v1583 = vsel %vm272, %v1343, %v1345
    %v1584 = vsel %vm272, %v1345, %v1347
    %v1585 = vsel %vm272, %v1347, %v1349
    %v1586 = vsel %vm272, %v1349, %v1351
    %v1587 = vsel %vm272, %v1351, %v1353
    %v1588 = vsel %vm272, %v1353, %v1355
    %v1589 = vsel %vm272, %v1355, %v1357
    %v1590 = vsel %vm272, %v1359, %v1361
    %v1591 = vsel %vm272, %v1361, %v1363
    %v1592 = vsel %vm272, %v1363, %v1365
    %v1593 = vsel %vm272, %v1365, %v1367
    %v1594 = vsel %vm272, %v1367, %v1369
    %v1595 = vsel %vm272, %v1369, %v1371
    %v1596 = vsel %vm272, %v1371, %v1373
    %v1597 = vsel %vm272, %v1373, %v1375
    %v1598 = vsel %vm272, %v1377, %v1379
    %v1599 = vsel %vm272, %v1379, %v1381
    %v1600 = vsel %vm272, %v1381, %v1383
    %v1601 = vsel %vm272, %v1383, %v1385
    %v1602 = vsel %vm272, %v1385, %v1387
    %v1603 = vsel %vm272, %v1387, %v1389
    %v1604 = vsel %vm272, %v1389, %v1391
    %v1605 = vsel %vm272, %v1391, %v1393
    %v1606 = vsel %vm272, %v1395, %v1397
    %v1607 = vsel %vm272, %v1397, %v1399
    %v1608 = vsel %vm272, %v1399, %v1401
    %v1609 = vsel %vm272, %v1401, %v1403
    %v1610 = vsel %vm272, %v1403, %v1405
    %v1611 = vsel %vm272, %v1405, %v1407
    %v1612 = vsel %vm272, %v1407, %v1409
    %v1613 = vsel %vm272, %v1409, %v1411
    %v1614 = vsel %vm272, %v1413, %v1415
    %v1615 = vsel %vm272, %v1415, %v1417
    %v1616 = vsel %vm272, %v1417, %v1419
    %v1617 = vsel %vm272, %v1419, %v1421
    %v1618 = vsel %vm272, %v1421, %v1423
    %v1619 = vsel %vm272, %v1423, %v1425
    %v1620 = vsel %vm272, %v1425, %v1427
    %v1621 = vsel %vm272, %v1427, %v1429
    %v1622 = vsel %vm272, %v1431, %v1433
    %v1623 = vsel %vm272, %v1433, %v1435
    %v1624 = vsel %vm272, %v1435, %v1437
    %v1625 = vsel %vm272, %v1437, %v1439
    %v1626 = vsel %vm272, %v1439, %v1441
    %v1627 = vsel %vm272, %v1441, %v1443
    %v1628 = vsel %vm272, %v1443, %v1445
    %v1629 = vsel %vm272, %v1445, %v1447
    %v1630 = vsel %vm272, %v1449, %v1451
    %v1631 = vsel %vm272, %v1451, %v1453
    %v1632 = vsel %vm272, %v1453, %v1455
    %v1633 = vsel %vm272, %v1455, %v1457
    %v1634 = vsel %vm272, %v1457, %v1459
    %v1635 = vsel %vm272, %v1459, %v1461
    %v1636 = vsel %vm272, %v1461, %v1463
    %v1637 = vsel %vm272, %v1463, %v1465
    %v1638 = vsel %vm272, %v1467, %v1469
    %v1639 = vsel %vm272, %v1469, %v1471
    %v1640 = vsel %vm272, %v1471, %v1473
    %v1641 = vsel %vm272, %v1473, %v1475
    %v1642 = vsel %vm272, %v1475, %v1477
    %v1643 = vsel %vm272, %v1477, %v1479
    %v1644 = vsel %vm272, %v1479, %v1481
    %v1645 = vsel %vm272, %v1481, %v1483
    %v1646 = vsel %vm272, %v1485, %v1487
    %v1647 = vsel %vm272, %v1487, %v1489
    %v1648 = vsel %vm272, %v1489, %v1491
    %v1649 = vsel %vm272, %v1491, %v1493
    %v1650 = vsel %vm272, %v1493, %v1495
    %v1651 = vsel %vm272, %v1495, %v1497
    %v1652 = vsel %vm272, %v1497, %v1499
    %v1653 = vsel %vm272, %v1499, %v1501
    %v1654 = vsel %vm272, %v1503, %v1505
    %v1655 = vsel %vm272, %v1505, %v1507
    %v1656 = vsel %vm272, %v1507, %v1509
    %v1657 = vsel %vm272, %v1509, %v1511
    %v1658 = vsel %vm272, %v1511, %v1513
    %v1659 = vsel %vm272, %v1513, %v1515
    %v1660 = vsel %vm272, %v1515, %v1517
    %v1661 = vsel %vm272, %v1517, %v1519
    %v1662 = vsel %vm272, %v1521, %v1523
    %v1663 = vsel %vm272, %v1523, %v1525
    %v1664 = vsel %vm272, %v1525, %v1527
    %v1665 = vsel %vm272, %v1527, %v1529
    %v1666 = vsel %vm272, %v1529, %v1531
    %v1667 = vsel %vm272, %v1531, %v1533
    %v1668 = vsel %vm272, %v1533, %v1535
    %v1669 = vsel %vm272, %v1535, %v1537
    %v1670 = vsel %vm272, %v1539, %v1541
    %v1671 = vsel %vm272, %v1541, %v1543
    %v1672 = vsel %vm272, %v1543, %v1545
    %v1673 = vsel %vm272, %v1545, %v1547
    %v1674 = vsel %vm272, %v1547, %v1549
    %v1675 = vsel %vm272, %v1549, %v1551
    %v1676 = vsel %vm272, %v1551, %v1553
    %v1677 = vsel %vm272, %v1553, %v1555
    %v1678 = vsel %vm272, %v1557, %v1559
    %v1679 = vsel %vm272, %v1559, %v1561
    %v1680 = vsel %vm272, %v1561, %v1563
    %v1681 = vsel %vm272, %v1563, %v1565
    %v1682 = vsel %vm272, %v1565, %v1567
    %v1683 = vsel %vm272, %v1567, %v1569
    %v1684 = vsel %vm272, %v1569, %v1571
    %v1685 = vsel %vm272, %v1571, %v1573
    %vm1790 = vcmask 719872
    %v1792 = vsel %vm1790, %v1248, 0
    %v1795 = vsel %vm469, %v1678, 0
    %v1798 = vsel %vm469, %v1679, 0
    %v1801 = vsel %vm469, %v1680, 0
    %v1804 = vsel %vm469, %v1681, 0
    %v1807 = vsel %vm469, %v1682, 0
    %v1810 = vsel %vm469, %v1683, 0
    %v1813 = vsel %vm469, %v1684, 0
    %v1816 = vsel %vm469, %v1685, 0
    %1818 = vmatprep.subr.bf16.mxu0 %v1575
    %1819 = vmatpush1.bf16.msra.mxu0 %v1574
    %1820 = vmatprep.subr.bf16.mxu0 %v1583
    %1821 = vmatpush1.bf16.msra.mxu0 %v1582
    %1822 = vmatprep.subr.bf16.mxu0 %v1591
    %1823 = vmatpush1.bf16.msra.mxu0 %v1590
    %1824 = vmatprep.subr.bf16.mxu0 %v1599
    %1825 = vmatpush1.bf16.msra.mxu0 %v1598
    %1826 = vmatprep.subr.bf16.mxu0 %v1607
    %1827 = vmatpush1.bf16.msra.mxu0 %v1606
    %1828 = vmatprep.subr.bf16.mxu0 %v1615
    %1829 = vmatpush1.bf16.msra.mxu0 %v1614
    %1830 = vmatprep.subr.bf16.mxu0 %v1623
    %1831 = vmatpush1.bf16.msra.mxu0 %v1622
    %1832 = vmatprep.subr.bf16.mxu0 %v1631
    %1833 = vmatpush1.bf16.msra.mxu0 %v1630
    %1834 = vmatprep.subr.bf16.mxu0 %v1639
    %1835 = vmatpush1.bf16.msra.mxu0 %v1638
    %1836 = vmatprep.subr.bf16.mxu0 %v1647
    %1837 = vmatpush1.bf16.msra.mxu0 %v1646
    %1838 = vmatprep.subr.bf16.mxu0 %v1655
    %1839 = vmatpush1.bf16.msra.mxu0 %v1654
    %1840 = vmatprep.subr.bf16.mxu0 %v1663
    %1841 = vmatpush1.bf16.msra.mxu0 %v1662
    %1842 = vmatprep.subr.bf16.mxu0 %v1671
    %1843 = vmatpush1.bf16.msra.mxu0 %v1670
    %1844 = vmatprep.subr.bf16.mxu0 %v1798
    %1845 = vmatpush1.bf16.msra.mxu0 %v1795
    %1846 = vmatprep.subr.bf16.mxu0 0
    %1847 = vmatpush1.bf16.msra.mxu0 0
    %1848 = vmatprep.subr.bf16.mxu0 0
    %1849 = vmatpush1.bf16.msra.mxu0 0
    %1850 = vmatprep.mubr.bf16.mxu0 %v1792
    %1851 = vmatmul.mubr.bf16.gmra.mrb[0].mxu0 %v1247
    %v1852 = vpop.f32.mrb[0].mxu0
    %v1853 = vadd.f32 %v1234, %v1852
    %v1854 = vpop.f32.mrb[0].mxu0
    %v1855 = vadd.f32 %v1234, %v1854
    %v1856 = vpop.f32.mrb[0].mxu0
    %v1857 = vadd.f32 %v1239, %v1856
    %v1858 = vpop.f32.mrb[0].mxu0
    %v1859 = vadd.f32 %v1239, %v1858
    %1860 = vdwg.mxu0
    %1861 = vmatprep.subr.bf16.mxu0 %v1577
    %1862 = vmatpush1.bf16.msra.mxu0 %v1576
    %1863 = vmatprep.subr.bf16.mxu0 %v1585
    %1864 = vmatpush1.bf16.msra.mxu0 %v1584
    %1865 = vmatprep.subr.bf16.mxu0 %v1593
    %1866 = vmatpush1.bf16.msra.mxu0 %v1592
    %1867 = vmatprep.subr.bf16.mxu0 %v1601
    %1868 = vmatpush1.bf16.msra.mxu0 %v1600
    %1869 = vmatprep.subr.bf16.mxu0 %v1609
    %1870 = vmatpush1.bf16.msra.mxu0 %v1608
    %1871 = vmatprep.subr.bf16.mxu0 %v1617
    %1872 = vmatpush1.bf16.msra.mxu0 %v1616
    %1873 = vmatprep.subr.bf16.mxu0 %v1625
    %1874 = vmatpush1.bf16.msra.mxu0 %v1624
    %1875 = vmatprep.subr.bf16.mxu0 %v1633
    %1876 = vmatpush1.bf16.msra.mxu0 %v1632
    %1877 = vmatprep.subr.bf16.mxu0 %v1641
    %1878 = vmatpush1.bf16.msra.mxu0 %v1640
    %1879 = vmatprep.subr.bf16.mxu0 %v1649
    %1880 = vmatpush1.bf16.msra.mxu0 %v1648
    %1881 = vmatprep.subr.bf16.mxu0 %v1657
    %1882 = vmatpush1.bf16.msra.mxu0 %v1656
    %1883 = vmatprep.subr.bf16.mxu0 %v1665
    %1884 = vmatpush1.bf16.msra.mxu0 %v1664
    %1885 = vmatprep.subr.bf16.mxu0 %v1673
    %1886 = vmatpush1.bf16.msra.mxu0 %v1672
    %1887 = vmatprep.subr.bf16.mxu0 %v1804
    %1888 = vmatpush1.bf16.msra.mxu0 %v1801
    %1889 = vmatprep.subr.bf16.mxu0 0
    %1890 = vmatpush1.bf16.msra.mxu0 0
    %1891 = vmatprep.subr.bf16.mxu0 0
    %1892 = vmatpush1.bf16.msra.mxu0 0
    %1893 = vmatprep.mubr.bf16.mxu0 %v1792
    %1894 = vmatmul.mubr.bf16.gmra.mrb[0].mxu0 %v1247
    %v1895 = vpop.f32.mrb[0].mxu0
    %v1896 = vadd.f32 %v1234, %v1895
    %v1897 = vpop.f32.mrb[0].mxu0
    %v1898 = vadd.f32 %v1234, %v1897
    %v1899 = vpop.f32.mrb[0].mxu0
    %v1900 = vadd.f32 %v1239, %v1899
    %v1901 = vpop.f32.mrb[0].mxu0
    %v1902 = vadd.f32 %v1239, %v1901
    %1903 = vdwg.mxu0
    %1904 = vmatprep.subr.bf16.mxu0 %v1579
    %1905 = vmatpush1.bf16.msra.mxu0 %v1578
    %1906 = vmatprep.subr.bf16.mxu0 %v1587
    %1907 = vmatpush1.bf16.msra.mxu0 %v1586
    %1908 = vmatprep.subr.bf16.mxu0 %v1595
    %1909 = vmatpush1.bf16.msra.mxu0 %v1594
    %1910 = vmatprep.subr.bf16.mxu0 %v1603
    %1911 = vmatpush1.bf16.msra.mxu0 %v1602
    %1912 = vmatprep.subr.bf16.mxu0 %v1611
    %1913 = vmatpush1.bf16.msra.mxu0 %v1610
    %1914 = vmatprep.subr.bf16.mxu0 %v1619
    %1915 = vmatpush1.bf16.msra.mxu0 %v1618
    %1916 = vmatprep.subr.bf16.mxu0 %v1627
    %1917 = vmatpush1.bf16.msra.mxu0 %v1626
    %1918 = vmatprep.subr.bf16.mxu0 %v1635
    %1919 = vmatpush1.bf16.msra.mxu0 %v1634
    %1920 = vmatprep.subr.bf16.mxu0 %v1643
    %1921 = vmatpush1.bf16.msra.mxu0 %v1642
    %1922 = vmatprep.subr.bf16.mxu0 %v1651
    %1923 = vmatpush1.bf16.msra.mxu0 %v1650
    %1924 = vmatprep.subr.bf16.mxu0 %v1659
    %1925 = vmatpush1.bf16.msra.mxu0 %v1658
    %1926 = vmatprep.subr.bf16.mxu0 %v1667
    %1927 = vmatpush1.bf16.msra.mxu0 %v1666
    %1928 = vmatprep.subr.bf16.mxu0 %v1675
    %1929 = vmatpush1.bf16.msra.mxu0 %v1674
    %1930 = vmatprep.subr.bf16.mxu0 %v1810
    %1931 = vmatpush1.bf16.msra.mxu0 %v1807
    %1932 = vmatprep.subr.bf16.mxu0 0
    %1933 = vmatpush1.bf16.msra.mxu0 0
    %1934 = vmatprep.subr.bf16.mxu0 0
    %1935 = vmatpush1.bf16.msra.mxu0 0
    %1936 = vmatprep.mubr.bf16.mxu0 %v1792
    %1937 = vmatmul.mubr.bf16.gmra.mrb[0].mxu0 %v1247
    %v1938 = vpop.f32.mrb[0].mxu0
    %v1939 = vadd.f32 %v1234, %v1938
    %v1940 = vpop.f32.mrb[0].mxu0
    %v1941 = vadd.f32 %v1234, %v1940
    %v1942 = vpop.f32.mrb[0].mxu0
    %v1943 = vadd.f32 %v1239, %v1942
    %v1944 = vpop.f32.mrb[0].mxu0
    %v1945 = vadd.f32 %v1239, %v1944
    %1946 = vdwg.mxu0
    %1947 = vmatprep.subr.bf16.mxu0 %v1581
    %1948 = vmatpush1.bf16.msra.mxu0 %v1580
    %1949 = vmatprep.subr.bf16.mxu0 %v1589
    %1950 = vmatpush1.bf16.msra.mxu0 %v1588
    %1951 = vmatprep.subr.bf16.mxu0 %v1597
    %1952 = vmatpush1.bf16.msra.mxu0 %v1596
    %1953 = vmatprep.subr.bf16.mxu0 %v1605
    %1954 = vmatpush1.bf16.msra.mxu0 %v1604
    %1955 = vmatprep.subr.bf16.mxu0 %v1613
    %1956 = vmatpush1.bf16.msra.mxu0 %v1612
    %1957 = vmatprep.subr.bf16.mxu0 %v1621
    %1958 = vmatpush1.bf16.msra.mxu0 %v1620
    %1959 = vmatprep.subr.bf16.mxu0 %v1629
    %1960 = vmatpush1.bf16.msra.mxu0 %v1628
    %1961 = vmatprep.subr.bf16.mxu0 %v1637
    %1962 = vmatpush1.bf16.msra.mxu0 %v1636
    %1963 = vmatprep.subr.bf16.mxu0 %v1645
    %1964 = vmatpush1.bf16.msra.mxu0 %v1644
    %1965 = vmatprep.subr.bf16.mxu0 %v1653
    %1966 = vmatpush1.bf16.msra.mxu0 %v1652
    %1967 = vmatprep.subr.bf16.mxu0 %v1661
    %1968 = vmatpush1.bf16.msra.mxu0 %v1660
    %1969 = vmatprep.subr.bf16.mxu0 %v1669
    %1970 = vmatpush1.bf16.msra.mxu0 %v1668
    %1971 = vmatprep.subr.bf16.mxu0 %v1677
    %1972 = vmatpush1.bf16.msra.mxu0 %v1676
    %1973 = vmatprep.subr.bf16.mxu0 %v1816
    %1974 = vmatpush1.bf16.msra.mxu0 %v1813
    %1975 = vmatprep.subr.bf16.mxu0 0
    %1976 = vmatpush1.bf16.msra.mxu0 0
    %1977 = vmatprep.subr.bf16.mxu0 0
    %1978 = vmatpush1.bf16.msra.mxu0 0
    %1979 = vmatprep.mubr.bf16.mxu0 %v1792
    %1980 = vmatmul.mubr.bf16.gmra.mrb[0].mxu0 %v1247
    %v1981 = vpop.f32.mrb[0].mxu0
    %v1982 = vadd.f32 %v1234, %v1981
    %v1983 = vpop.f32.mrb[0].mxu0
    %v1984 = vadd.f32 %v1234, %v1983
    %v1985 = vpop.f32.mrb[0].mxu0
    %v1986 = vadd.f32 %v1239, %v1985
    %v1987 = vpop.f32.mrb[0].mxu0
    %v1988 = vadd.f32 %v1239, %v1987
    %1989 = vdwg.mxu0
    %1990 = vst [vmem:[%s3] sm:$0xff] %v1853
    %1991 = vst [vmem:[%s3 + $0x8] sm:$0xff] %v1855
    %1992 = vst [vmem:[%s3 + $0x10] sm:$0xff] %v1896
    %1993 = vst [vmem:[%s3 + $0x18] sm:$0xff] %v1898
    %1994 = vst [vmem:[%s3 + $0x20] sm:$0xff] %v1939
    %1995 = vst [vmem:[%s3 + $0x28] sm:$0xff] %v1941
    %1996 = vst [vmem:[%s3 + $0x30] sm:$0xff] %v1982
    %1997 = vst [vmem:[%s3 + $0x38] sm:$0xff] %v1984
    %1998 = vst [vmem:[%s3 + $0x40] sm:$0xf] %v1857
    %1999 = vst [vmem:[%s3 + $0x48] sm:$0xf] %v1859
    %2000 = vst [vmem:[%s3 + $0x50] sm:$0xf] %v1900
    %2001 = vst [vmem:[%s3 + $0x58] sm:$0xf] %v1902
    %2002 = vst [vmem:[%s3 + $0x60] sm:$0xf] %v1943
    %2003 = vst [vmem:[%s3 + $0x68] sm:$0xf] %v1945
    %2004 = vst [vmem:[%s3 + $0x70] sm:$0xf] %v1986
    %2005 = vst [vmem:[%s3 + $0x78] sm:$0xf] %v1988
    // Predicated region
    $region18: #{tpu_custom_call.1} parent=1 // pred_check
      _
    $region19: #{tpu_custom_call.1} parent=1 // pred_check_branch
      %2007 = sbr.rel (0) target = $region21
    $region20: #{tpu_custom_call.1} parent=1 // pred_region
      _
    $region21: #{tpu_custom_call.1} parent=1 // pred_fallthru
      _
    // Predicated region
    $region22: #{tpu_custom_call.1} parent=1 // pred_check
      _
    $region23: #{tpu_custom_call.1} parent=1 // pred_check_branch
      %2009 = sbr.rel (0) target = $region25
    $region24: #{tpu_custom_call.1} parent=1 // pred_region
      _
    $region25: #{tpu_custom_call.1} parent=1 // pred_fallthru
      _
    %2010 = vsyncpa [#allocation3], 1

</llo_original>
